<compile_context>
chip_gen: v7x
topology: tpu7x:2x2x1
jax: 0.10.0
libtpu: 0.0.40
codegen_flags: <defaults>
</compile_context>

<pallas_src>
import jax
import jax.numpy as jnp
from jax.experimental import pallas as pl
from jax.experimental.pallas import tpu as pltpu

INPUT_SIZE = 32      # synthetic input_size (X_train.shape[1])
HIDDEN = 128
OUT = 7008
BATCH = 8
TN = 3584            # output-dim tile width (multiple of 128); 7168 = 2 * 3584
N_PAD = pl.cdiv(OUT, TN) * TN   # 7168 -> weight stream padded once at init


def fused_mlp_kernel(x_ref, w1_ref, b1_ref, w2_ref, b2_ref, o_ref):
    # Layer 1 (tiny, recomputed per output tile — safe under megacore sharding).
    h = jnp.dot(x_ref[...], w1_ref[...], preferred_element_type=jnp.float32)
    h = jnp.maximum(h + b1_ref[...], 0.0).astype(jnp.bfloat16)
    # Layer 2 tile: bf16 operands on the MXU, f32 accumulation.
    o = jnp.dot(h, w2_ref[...], preferred_element_type=jnp.float32)
    o_ref[...] = o + b2_ref[...]


@jax.jit
def mlp_forward(x, w1, b1, w2_bf16_padded, b2_padded):
    B, D = x.shape
    H = w1.shape[1]
    return pl.pallas_call(
        fused_mlp_kernel,
        # True (unpadded) output shape: the last N tile is ragged and Pallas
        # masks its stores, so no trailing slice/copy is needed.
        out_shape=jax.ShapeDtypeStruct((B, OUT), jnp.float32),
        grid_spec=pltpu.PrefetchScalarGridSpec(
            num_scalar_prefetch=0,
            grid=(N_PAD // TN,),                            # 2 steps
            in_specs=[
                pl.BlockSpec((B, D), lambda j: (0, 0)),     # x        (resident)
                pl.BlockSpec((D, H), lambda j: (0, 0)),     # w1       (resident)
                pl.BlockSpec((1, H), lambda j: (0, 0)),     # b1       (resident)
                pl.BlockSpec((H, TN), lambda j: (0, j)),    # w2 tile  (streamed, bf16)
                pl.BlockSpec((1, TN), lambda j: (0, j)),    # b2 tile  (streamed)
            ],
            out_specs=pl.BlockSpec((B, TN), lambda j: (0, j)),
        ),
        compiler_params=pltpu.CompilerParams(
            dimension_semantics=("parallel",),  # 2 tiles -> both v7x TensorCores
            vmem_limit_bytes=16 << 20,
        ),
    )(x, w1, b1, w2_bf16_padded, b2_padded)


def init_params(key, input_size, hidden, out):
    # Deterministic init mimicking nn.Linear (uniform in +-1/sqrt(fan_in)).
    k1, k2, k3, k4 = jax.random.split(key, 4)
    bound1 = 1.0 / jnp.sqrt(input_size)
    bound2 = 1.0 / jnp.sqrt(hidden)
    w1 = jax.random.uniform(k1, (input_size, hidden), jnp.float32, -bound1, bound1)
    b1 = jax.random.uniform(k2, (1, hidden), jnp.float32, -bound1, bound1)
    w2 = jax.random.uniform(k3, (hidden, out), jnp.float32, -bound2, bound2)
    b2 = jax.random.uniform(k4, (1, out), jnp.float32, -bound2, bound2)
    return w1, b1, w2, b2


def prepare_streamed_params(w2, b2):
    # One-time parameter prep, hoisted out of the forward path:
    # bf16 cast of the big weight matrix + zero-pad of w2/b2 up to N_PAD columns
    # so every streamed weight/bias tile is full and lane-dense.
    w2_bf16_p = jnp.pad(w2.astype(jnp.bfloat16), ((0, 0), (0, N_PAD - OUT)))
    b2_p = jnp.pad(b2, ((0, 0), (0, N_PAD - OUT)))
    return w2_bf16_p, b2_p


if __name__ == "__main__":
    key = jax.random.PRNGKey(0)
    kx, kp = jax.random.split(key)
    x = jax.random.normal(kx, (BATCH, INPUT_SIZE), jnp.float32)
    w1, b1, w2, b2 = init_params(kp, INPUT_SIZE, HIDDEN, OUT)
    w2_bf16_p, b2_p = prepare_streamed_params(w2, b2)

    out = mlp_forward(x, w1, b1, w2_bf16_p, b2_p)
    jax.block_until_ready(out)

    # Reference check in plain JAX, using the same bf16-rounded operands the
    # kernel sees (h rounded to bf16, w2 in bf16), with f32 accumulation.
    hp = jax.lax.Precision.HIGHEST
    h_ref = jnp.maximum(
        jnp.dot(x, w1, precision=hp) + b1, 0.0
    ).astype(jnp.bfloat16).astype(jnp.float32)
    ref = jnp.dot(
        h_ref, w2.astype(jnp.bfloat16).astype(jnp.float32), precision=hp
    ) + b2

    assert out.shape == (BATCH, OUT)
    assert jnp.allclose(out, ref, atol=1e-2, rtol=1e-2)

    print("KERNEL_OK")
</pallas_src>

<mosaic_0001>
module attributes {stable_mosaic.version = 11 : i64} {
  func.func @fused_mlp_kernel(%arg0: i32, %arg1: memref<8x32xf32, #tpu.memory_space<vmem>>, %arg2: memref<32x128xf32, #tpu.memory_space<vmem>>, %arg3: memref<1x128xf32, #tpu.memory_space<vmem>>, %arg4: memref<128x3584xbf16, #tpu.memory_space<vmem>>, %arg5: memref<1x3584xf32, #tpu.memory_space<vmem>>, %arg6: memref<8x3584xf32, #tpu.memory_space<vmem>>) attributes {dimension_semantics = [#tpu.dimension_semantics<parallel>], iteration_bounds = array<i64: 2>, scalar_prefetch = 0 : i64, scratch_operands = 0 : i64, tpu.core_type = #tpu.core_type<tc>, window_params = [{pipeline_mode = #tpu.pipeline_mode<synchronous>, transform_indices = @transform_0, window_bounds = array<i64: 8, 32>}, {pipeline_mode = #tpu.pipeline_mode<synchronous>, transform_indices = @transform_1, window_bounds = array<i64: 32, 128>}, {pipeline_mode = #tpu.pipeline_mode<synchronous>, transform_indices = @transform_2, window_bounds = array<i64: 1, 128>}, {transform_indices = @transform_3, window_bounds = array<i64: 128, 3584>}, {transform_indices = @transform_4, window_bounds = array<i64: 1, 3584>}, {transform_indices = @transform_5, window_bounds = array<i64: 8, 3584>}]} {
    %c0 = arith.constant 0 : index
    %c0_0 = arith.constant 0 : index
    %0 = vector.load %arg1[%c0, %c0_0] : memref<8x32xf32, #tpu.memory_space<vmem>>, vector<8x32xf32>
    %c0_1 = arith.constant 0 : index
    %c0_2 = arith.constant 0 : index
    %1 = vector.load %arg2[%c0_1, %c0_2] : memref<32x128xf32, #tpu.memory_space<vmem>>, vector<32x128xf32>
    %cst = arith.constant dense<0.000000e+00> : vector<8x128xf32>
    %2 = tpu.matmul %0, %1, %cst {dimension_numbers = #tpu.dot_dimension_numbers<[1], [0], [0], [1], [0, 0, 1, 1], [], []>} : vector<8x32xf32>, vector<32x128xf32>, vector<8x128xf32> -> vector<8x128xf32>
    %c0_3 = arith.constant 0 : index
    %c0_4 = arith.constant 0 : index
    %3 = vector.load %arg3[%c0_3, %c0_4] : memref<1x128xf32, #tpu.memory_space<vmem>>, vector<1x128xf32>
    %4 = vector.broadcast %3 : vector<1x128xf32> to vector<8x128xf32>
    %5 = arith.addf %2, %4 : vector<8x128xf32>
    %cst_5 = arith.constant 0.000000e+00 : f32
    %6 = vector.broadcast %cst_5 : f32 to vector<8x128xf32>
    %7 = arith.maximumf %5, %6 : vector<8x128xf32>
    %8 = arith.truncf %7 : vector<8x128xf32> to vector<8x128xbf16>
    %c0_6 = arith.constant 0 : index
    %c0_7 = arith.constant 0 : index
    %9 = vector.load %arg4[%c0_6, %c0_7] : memref<128x3584xbf16, #tpu.memory_space<vmem>>, vector<128x3584xbf16>
    %cst_8 = arith.constant dense<0.000000e+00> : vector<8x3584xf32>
    %10 = tpu.matmul %8, %9, %cst_8 {dimension_numbers = #tpu.dot_dimension_numbers<[1], [0], [0], [1], [0, 0, 1, 1], [], []>} : vector<8x128xbf16>, vector<128x3584xbf16>, vector<8x3584xf32> -> vector<8x3584xf32>
    %c0_9 = arith.constant 0 : index
    %c0_10 = arith.constant 0 : index
    %11 = vector.load %arg5[%c0_9, %c0_10] : memref<1x3584xf32, #tpu.memory_space<vmem>>, vector<1x3584xf32>
    %12 = vector.broadcast %11 : vector<1x3584xf32> to vector<8x3584xf32>
    %13 = arith.addf %10, %12 : vector<8x3584xf32>
    %c0_11 = arith.constant 0 : index
    %c0_12 = arith.constant 0 : index
    %14 = vector.load %arg6[%c0_11, %c0_12] : memref<8x3584xf32, #tpu.memory_space<vmem>>, vector<8x3584xf32>
    tpu.vector_store %arg6[%c0_11, %c0_12], %13 {strides = array<i32>} : memref<8x3584xf32, #tpu.memory_space<vmem>>, vector<8x3584xf32>,
    return
  }
  func.func @transform_0(%arg0: i32) -> (i32, i32) {
    %c0_i32 = arith.constant 0 : i32
    %c0_i32_0 = arith.constant 0 : i32
    %c0_i32_1 = arith.constant 0 : i32
    return %c0_i32, %c0_i32_0 : i32, i32
  }
  func.func @transform_1(%arg0: i32) -> (i32, i32) {
    %c0_i32 = arith.constant 0 : i32
    %c0_i32_0 = arith.constant 0 : i32
    %c0_i32_1 = arith.constant 0 : i32
    return %c0_i32, %c0_i32_0 : i32, i32
  }
  func.func @transform_2(%arg0: i32) -> (i32, i32) {
    %c0_i32 = arith.constant 0 : i32
    %c0_i32_0 = arith.constant 0 : i32
    %c0_i32_1 = arith.constant 0 : i32
    return %c0_i32, %c0_i32_0 : i32, i32
  }
  func.func @transform_3(%arg0: i32) -> (i32, i32) {
    %c0_i32 = arith.constant 0 : i32
    %c0_i32_0 = arith.constant 0 : i32
    return %c0_i32, %arg0 : i32, i32
  }
  func.func @transform_4(%arg0: i32) -> (i32, i32) {
    %c0_i32 = arith.constant 0 : i32
    %c0_i32_0 = arith.constant 0 : i32
    return %c0_i32, %arg0 : i32, i32
  }
  func.func @transform_5(%arg0: i32) -> (i32, i32) {
    %c0_i32 = arith.constant 0 : i32
    %c0_i32_0 = arith.constant 0 : i32
    return %c0_i32, %arg0 : i32, i32
  }
}

</mosaic_0001>

<llo_original>
// kernel: mlp_forward.1
$region0: #{mlp_forward.1}
  #allocation0 [shape = 'u32[]', space=smem, size = 0x4, offset = 0x4, fixed_abs, tag = 'smem constant byte address 0x4 - core index']
  #allocation1 [shape = 'u32[144,128]{1,0:T(1,128)}', space=vmem, size = 0x12000, scoped, tag = 'internal scratch']
  %s0 = inlined_call_operand.hbm [shape: f32[8,32], index: 0, kind: input, shape index: {}]
  %s1 = inlined_call_operand.hbm [shape: f32[32,128], index: 1, kind: input, shape index: {}]
  %s2 = inlined_call_operand.hbm [shape: f32[1,128], index: 2, kind: input, shape index: {}]
  %s3 = inlined_call_operand.hbm [shape: bf16[128,7168], index: 3, kind: input, shape index: {}]
  %s4 = inlined_call_operand.hbm [shape: f32[1,7168], index: 4, kind: input, shape index: {}]
  %s5 = inlined_call_operand.hbm [shape: f32[8,7008], index: 5, kind: output, shape index: {}]
  %s6 = sld [smem:[#allocation0]]
  $region73: #{mlp_forward.1} parent=0
    _
  %s8 = ssub.s32 1, %s6
  %s9 = scalar_select 0, %s8, %s6
  $region1: #{mlp_forward.1} parent=0
    #allocation2 [shape = 'u8[4096]{0}', space=vmem, size = 0x1000, scoped, tag = 'input window, operand 0, single buffered']
    #allocation3 [shape = 's32[2]{0}', space=sflag, size = 0x8, scoped, tag = 'scoped memory for mlp_forward.1']
    #allocation4 [shape = 's32[2]{0}', space=sflag, size = 0x8, scoped, tag = 'scoped memory for mlp_forward.1']
    #allocation5 [shape = 'u8[16384]{0}', space=vmem, size = 0x4000, scoped, tag = 'input window, operand 1, single buffered']
    #allocation6 [shape = 's32[1]{0}', space=sflag, size = 0x4, scoped, tag = 'scoped memory for mlp_forward.1']
    #allocation7 [shape = 'u8[512]{0}', space=vmem, size = 0x400, scoped, tag = 'input window, operand 2, single buffered']
    #allocation8 [shape = 'u8[1835008]{0}', space=vmem, size = 0x1c0000, scoped, tag = 'input window, operand 3']
    #allocation9 [shape = 's32[2]{0}', space=sflag, size = 0x8, scoped, tag = 'scoped memory for mlp_forward.1']
    #allocation10 [shape = 'u8[28672]{0}', space=vmem, size = 0x7000, scoped, tag = 'input window, operand 4']
    #allocation11 [shape = 'u8[229376]{0}', space=vmem, size = 0x38000, scoped, tag = 'output window, operand 0']
    %10 = vsyncpa [#allocation3], 0
    %11 = vsyncpa [#allocation6], 0
    %12 = vsyncpa [#allocation9], 0
    %s13 = scalar_lea.sflag [#allocation9], 1
    %14 = vsyncpa %s13, 0
    %15 = vsyncpa [#allocation4], 0
    %s16 = scalar_lea.sflag [#allocation4], 1
    %17 = vsyncpa %s16, 0
    loop: start=0, step=1, limit=4
    $region2: #{mlp_forward.1} parent=1 // loop_pre_header
      _
    $region3: #{mlp_forward.1} parent=1 // loop_header
      %s19 = sphi 0, %s23
      %p20 = scmp.ge.s32.totalorder %s19, 4
      %s27 = sphi 0, %s27
      %s29 = sphi 0, %s27
      %s30 = sphi 0, %s29
      %s44 = sphi 0, %s30
      %s48 = sphi 0, %s48
      %s50 = sphi 0, %s48
      %s51 = sphi 0, %s50
      %s65 = sphi 0, %s51
      %s69 = sphi 0, %s69
      %s71 = sphi 0, %s69
      %s72 = sphi 0, %s71
      %s86 = sphi 0, %s72
      %s92 = sphi 0, %s94
      %s95 = sphi 0, %s92
      %s96 = sphi 0, %s95
      %s112 = sphi 0, %s96
      %s118 = sphi 0, %s120
      %s121 = sphi 0, %s118
      %s122 = sphi 0, %s121
      %s138 = sphi 0, %s122
      %s144 = sphi 0, %s146
      %s147 = sphi 0, %s144
      %s148 = sphi 0, %s147
      %s164 = sphi 0, %s148
    $region4: #{mlp_forward.1} parent=1 // loop_header_branch
      %22 = sbr.rel (%p20) target = $region8
    $region5: #{mlp_forward.1} parent=1 // loop_body
      %s24 = ssub.s32 %s19, 1
      %s25 = ssub.s32 %s19, 2
      %s26 = sadd.s32 %s19, 1
      %s28 = sadd.s32 %s27, 1
      %p31 = scmp.eq.s32.totalorder %s19, 1
      %p32 = scmp.ne.s32.totalorder %s27, %s29
      %p33 = scmp.eq.s32.totalorder %s19, 0
      %p34 = por %p32, %p33
      %p35 = scmp.ne.s32.totalorder %s27, %s29
      %p36 = scmp.eq.s32.totalorder %s24, 1
      %p37 = por %p35, %p36
      %p38 = scmp.ne.s32.totalorder %s29, %s30
      %p39 = scmp.eq.s32.totalorder %s24, 0
      %p40 = por %p38, %p39
      %p41 = scmp.ne.s32.totalorder %s29, %s30
      %p42 = scmp.eq.s32.totalorder %s25, 1
      %p43 = por %p41, %p42
      %p45 = scmp.ne.s32.totalorder %s30, %s44
      %p46 = scmp.eq.s32.totalorder %s25, 0
      %p47 = por %p45, %p46
      %s49 = sadd.s32 %s48, 1
      %p52 = scmp.eq.s32.totalorder %s19, 1
      %p53 = scmp.ne.s32.totalorder %s48, %s50
      %p54 = scmp.eq.s32.totalorder %s19, 0
      %p55 = por %p53, %p54
      %p56 = scmp.ne.s32.totalorder %s48, %s50
      %p57 = scmp.eq.s32.totalorder %s24, 1
      %p58 = por %p56, %p57
      %p59 = scmp.ne.s32.totalorder %s50, %s51
      %p60 = scmp.eq.s32.totalorder %s24, 0
      %p61 = por %p59, %p60
      %p62 = scmp.ne.s32.totalorder %s50, %s51
      %p63 = scmp.eq.s32.totalorder %s25, 1
      %p64 = por %p62, %p63
      %p66 = scmp.ne.s32.totalorder %s51, %s65
      %p67 = scmp.eq.s32.totalorder %s25, 0
      %p68 = por %p66, %p67
      %s70 = sadd.s32 %s69, 1
      %p73 = scmp.eq.s32.totalorder %s19, 1
      %p74 = scmp.ne.s32.totalorder %s69, %s71
      %p75 = scmp.eq.s32.totalorder %s19, 0
      %p76 = por %p74, %p75
      %p77 = scmp.ne.s32.totalorder %s69, %s71
      %p78 = scmp.eq.s32.totalorder %s24, 1
      %p79 = por %p77, %p78
      %p80 = scmp.ne.s32.totalorder %s71, %s72
      %p81 = scmp.eq.s32.totalorder %s24, 0
      %p82 = por %p80, %p81
      %p83 = scmp.ne.s32.totalorder %s71, %s72
      %p84 = scmp.eq.s32.totalorder %s25, 1
      %p85 = por %p83, %p84
      %p87 = scmp.ne.s32.totalorder %s72, %s86
      %p88 = scmp.eq.s32.totalorder %s25, 0
      %p89 = por %p87, %p88
      %s90 = ssub.s32 %s19, %s26
      %p91 = scmp.eq.s32.totalorder %s90, 0
      %s93 = sadd.s32 %s92, 1
      %s94 = scalar_select %p91, %s92, %s93
      %p97 = pneg %p91
      %p98 = scmp.eq.s32.totalorder %s19, 1
      %p99 = por %p97, %p98
      %p100 = scmp.ne.s32.totalorder %s92, %s95
      %p101 = scmp.eq.s32.totalorder %s19, 0
      %p102 = por %p100, %p101
      %p103 = scmp.ne.s32.totalorder %s92, %s95
      %p104 = scmp.eq.s32.totalorder %s24, 1
      %p105 = por %p103, %p104
      %p106 = scmp.ne.s32.totalorder %s95, %s96
      %p107 = scmp.eq.s32.totalorder %s24, 0
      %p108 = por %p106, %p107
      %p109 = scmp.ne.s32.totalorder %s95, %s96
      %p110 = scmp.eq.s32.totalorder %s25, 1
      %p111 = por %p109, %p110
      %p113 = scmp.ne.s32.totalorder %s96, %s112
      %p114 = scmp.eq.s32.totalorder %s25, 0
      %p115 = por %p113, %p114
      %s116 = ssub.s32 %s19, %s26
      %p117 = scmp.eq.s32.totalorder %s116, 0
      %s119 = sadd.s32 %s118, 1
      %s120 = scalar_select %p117, %s118, %s119
      %p123 = pneg %p117
      %p124 = scmp.eq.s32.totalorder %s19, 1
      %p125 = por %p123, %p124
      %p126 = scmp.ne.s32.totalorder %s118, %s121
      %p127 = scmp.eq.s32.totalorder %s19, 0
      %p128 = por %p126, %p127
      %p129 = scmp.ne.s32.totalorder %s118, %s121
      %p130 = scmp.eq.s32.totalorder %s24, 1
      %p131 = por %p129, %p130
      %p132 = scmp.ne.s32.totalorder %s121, %s122
      %p133 = scmp.eq.s32.totalorder %s24, 0
      %p134 = por %p132, %p133
      %p135 = scmp.ne.s32.totalorder %s121, %s122
      %p136 = scmp.eq.s32.totalorder %s25, 1
      %p137 = por %p135, %p136
      %p139 = scmp.ne.s32.totalorder %s122, %s138
      %p140 = scmp.eq.s32.totalorder %s25, 0
      %p141 = por %p139, %p140
      %s142 = ssub.s32 %s19, %s26
      %p143 = scmp.eq.s32.totalorder %s142, 0
      %s145 = sadd.s32 %s144, 1
      %s146 = scalar_select %p143, %s144, %s145
      %p149 = pneg %p143
      %p150 = scmp.eq.s32.totalorder %s19, 1
      %p151 = por %p149, %p150
      %p152 = scmp.ne.s32.totalorder %s144, %s147
      %p153 = scmp.eq.s32.totalorder %s19, 0
      %p154 = por %p152, %p153
      %p155 = scmp.ne.s32.totalorder %s144, %s147
      %p156 = scmp.eq.s32.totalorder %s24, 1
      %p157 = por %p155, %p156
      %p158 = scmp.ne.s32.totalorder %s147, %s148
      %p159 = scmp.eq.s32.totalorder %s24, 0
      %p160 = por %p158, %p159
      %p161 = scmp.ne.s32.totalorder %s147, %s148
      %p162 = scmp.eq.s32.totalorder %s25, 1
      %p163 = por %p161, %p162
      %p165 = scmp.ne.s32.totalorder %s148, %s164
      %p166 = scmp.eq.s32.totalorder %s25, 0
      %p167 = por %p165, %p166
      %p168 = scmp.le.s32.totalorder 1, %s19
      %p169 = scmp.lt.s32.totalorder %s19, 3
      %p170 = pnand %p168, %p169
      %p171 = pneg %p170
      // Predicated region
      $region9: #{mlp_forward.1} parent=5 // pred_check
        _
      $region10: #{mlp_forward.1} parent=5 // pred_check_branch
        %173 = sbr.rel (%p170) target = $region12
      $region11: #{mlp_forward.1} parent=5 // pred_region
        %s174 = ssub.s32 %s19, 1
        // Predicated region
        $region13: #{mlp_forward.1} parent=11 // pred_check
          %p175 = pneg %p40
        $region14: #{mlp_forward.1} parent=11 // pred_check_branch
          %177 = sbr.rel (%p175) target = $region16
        $region15: #{mlp_forward.1} parent=11 // pred_region
          %s179 = ssub.s32 128, 128
          %180 = vsyncadd [#allocation3], %s179
          %s182 = sshll.u32 [#allocation2], 4
          %s183 = int_to_ptr.vmem [resolvable:$true] %s182
          %185 = dma.hbm_to_vmem [thread:$0]  %s0, 128, %s183, [#allocation3]
        $region16: #{mlp_forward.1} parent=11 // pred_fallthru
          _
        // Predicated region
        $region17: #{mlp_forward.1} parent=11 // pred_check
          %p186 = pneg %p61
        $region18: #{mlp_forward.1} parent=11 // pred_check_branch
          %188 = sbr.rel (%p186) target = $region20
        $region19: #{mlp_forward.1} parent=11 // pred_region
          %s190 = ssub.s32 512, 512
          %191 = vsyncadd [#allocation6], %s190
          %s192 = sshll.u32 [#allocation5], 4
          %s193 = int_to_ptr.vmem [resolvable:$true] %s192
          %198 = dma.hbm_to_vmem [thread:$0]  %s1, 512, %s193, [#allocation6], 128, 128, 8
        $region20: #{mlp_forward.1} parent=11 // pred_fallthru
          _
        // Predicated region
        $region21: #{mlp_forward.1} parent=11 // pred_check
          %p199 = pneg %p82
        $region22: #{mlp_forward.1} parent=11 // pred_check_branch
          %201 = sbr.rel (%p199) target = $region24
        $region23: #{mlp_forward.1} parent=11 // pred_region
          %s203 = ssub.s32 16, 16
          %204 = vsyncadd [#allocation6], %s203
          %s206 = sshll.u32 [#allocation7], 4
          %s207 = int_to_ptr.vmem [resolvable:$true] %s206
          %209 = dma.hbm_to_vmem [thread:$0]  %s2, 16, %s207, [#allocation6]
        $region24: #{mlp_forward.1} parent=11 // pred_fallthru
          _
      $region12: #{mlp_forward.1} parent=5 // pred_fallthru
        _
      %p210 = scmp.lt.s32.totalorder %s19, 2
      // Predicated region
      $region25: #{mlp_forward.1} parent=5 // pred_check
        %p211 = pneg %p210
      $region26: #{mlp_forward.1} parent=5 // pred_check_branch
        %213 = sbr.rel (%p211) target = $region28
      $region27: #{mlp_forward.1} parent=5 // pred_region
        // Predicated region
        $region29: #{mlp_forward.1} parent=27 // pred_check
          %p214 = pneg %p102
        $region30: #{mlp_forward.1} parent=27 // pred_check_branch
          %216 = sbr.rel (%p214) target = $region32
        $region31: #{mlp_forward.1} parent=27 // pred_region
          %s217 = sand.u32 %s19, 1
          %s218 = scalar_lea.sflag [#allocation9], %s217
          %s219 = sand.u32 %s92, 1
          %s220 = smul.addr %s219, 1792
          %s221 = scalar_lea.vmem [#allocation8], %s220
          %s222 = smul.u32 28, %s19
          %s224 = ssub.s32 28672, 28672
          %225 = vsyncadd %s218, %s224
          %s226 = smul.addr %s222, 64
          %s227 = scalar_lea.hbm %s3, %s226
          %s228 = sshll.u32 %s221, 4
          %s229 = int_to_ptr.vmem [resolvable:$true] %s228
          %234 = dma.hbm_to_vmem [thread:$0]  %s227, 28672, %s229, %s218, 3584, 1792, 112
        $region32: #{mlp_forward.1} parent=27 // pred_fallthru
          _
        // Predicated region
        $region33: #{mlp_forward.1} parent=27 // pred_check
          %p235 = pneg %p128
        $region34: #{mlp_forward.1} parent=27 // pred_check_branch
          %237 = sbr.rel (%p235) target = $region36
        $region35: #{mlp_forward.1} parent=27 // pred_region
          %s238 = sand.u32 %s19, 1
          %s239 = scalar_lea.sflag [#allocation9], %s238
          %s240 = sand.u32 %s118, 1
          %s241 = smul.addr %s240, 28
          %s242 = scalar_lea.vmem [#allocation10], %s241
          %s243 = smul.u32 28, %s19
          %s245 = ssub.s32 448, 448
          %246 = vsyncadd %s239, %s245
          %s247 = smul.addr %s243, 16
          %s248 = scalar_lea.hbm %s4, %s247
          %s250 = sshll.u32 %s242, 4
          %s251 = int_to_ptr.vmem [resolvable:$true] %s250
          %253 = dma.hbm_to_vmem [thread:$0]  %s248, 448, %s251, %s239
        $region36: #{mlp_forward.1} parent=27 // pred_fallthru
          _
      $region28: #{mlp_forward.1} parent=5 // pred_fallthru
        _
      %p254 = scmp.le.s32.totalorder 1, %s19
      %p255 = scmp.lt.s32.totalorder %s19, 3
      %p256 = pnand %p254, %p255
      %p257 = pneg %p256
      // Predicated region
      $region37: #{mlp_forward.1} parent=5 // pred_check
        _
      $region38: #{mlp_forward.1} parent=5 // pred_check_branch
        %259 = sbr.rel (%p256) target = $region40
      $region39: #{mlp_forward.1} parent=5 // pred_region
        %s260 = ssub.s32 %s19, 1
        // Predicated region
        $region41: #{mlp_forward.1} parent=39 // pred_check
          %p261 = pneg %p40
        $region42: #{mlp_forward.1} parent=39 // pred_check_branch
          %263 = sbr.rel (%p261) target = $region44
        $region43: #{mlp_forward.1} parent=39 // pred_region
          %264 = dma.done [#allocation3], 128
        $region44: #{mlp_forward.1} parent=39 // pred_fallthru
          _
        // Predicated region
        $region45: #{mlp_forward.1} parent=39 // pred_check
          %p265 = pneg %p61
        $region46: #{mlp_forward.1} parent=39 // pred_check_branch
          %267 = sbr.rel (%p265) target = $region48
        $region47: #{mlp_forward.1} parent=39 // pred_region
          %268 = dma.done [#allocation6], 512
        $region48: #{mlp_forward.1} parent=39 // pred_fallthru
          _
        // Predicated region
        $region49: #{mlp_forward.1} parent=39 // pred_check
          %p269 = pneg %p82
        $region50: #{mlp_forward.1} parent=39 // pred_check_branch
          %271 = sbr.rel (%p269) target = $region52
        $region51: #{mlp_forward.1} parent=39 // pred_region
          %272 = dma.done [#allocation6], 16
        $region52: #{mlp_forward.1} parent=39 // pred_fallthru
          _
        %s273 = sand.u32 %s24, 1
        %s274 = scalar_lea.sflag [#allocation9], %s273
        %s275 = sand.u32 %s95, 1
        %s276 = smul.addr %s275, 1792
        %s277 = scalar_lea.vmem [#allocation8], %s276
        // Predicated region
        $region53: #{mlp_forward.1} parent=39 // pred_check
          %p278 = pneg %p108
        $region54: #{mlp_forward.1} parent=39 // pred_check_branch
          %280 = sbr.rel (%p278) target = $region56
        $region55: #{mlp_forward.1} parent=39 // pred_region
          %281 = dma.done %s274, 28672
        $region56: #{mlp_forward.1} parent=39 // pred_fallthru
          _
        %s282 = sand.u32 %s24, 1
        %s283 = scalar_lea.sflag [#allocation9], %s282
        %s284 = sand.u32 %s121, 1
        %s285 = smul.addr %s284, 28
        %s286 = scalar_lea.vmem [#allocation10], %s285
        // Predicated region
        $region57: #{mlp_forward.1} parent=39 // pred_check
          %p287 = pneg %p134
        $region58: #{mlp_forward.1} parent=39 // pred_check_branch
          %289 = sbr.rel (%p287) target = $region60
        $region59: #{mlp_forward.1} parent=39 // pred_region
          %290 = dma.done %s283, 448
        $region60: #{mlp_forward.1} parent=39 // pred_fallthru
          _
        %p291 = pneg %p40
        %p292 = pneg %p37
        %p293 = pneg %p61
        %p294 = pneg %p58
        %p295 = pneg %p82
        %p296 = pneg %p79
        %s297 = sand.u32 %s24, 1
        %s298 = scalar_lea.sflag [#allocation9], %s297
        %s299 = sand.u32 %s95, 1
        %s300 = smul.addr %s299, 1792
        %s301 = scalar_lea.vmem [#allocation8], %s300
        %p302 = pneg %p108
        %p303 = pneg %p105
        %s304 = sand.u32 %s24, 1
        %s305 = scalar_lea.sflag [#allocation9], %s304
        %s306 = sand.u32 %s121, 1
        %s307 = smul.addr %s306, 28
        %s308 = scalar_lea.vmem [#allocation10], %s307
        %p309 = pneg %p134
        %p310 = pneg %p131
        %p311 = pneg %p160
        %p312 = pneg %p157
        %s313 = sand.u32 %s147, 1
        %s314 = scalar_lea.sflag [#allocation4], %s313
        %s315 = sand.u32 %s147, 1
        %s316 = smul.addr %s315, 224
        %s317 = scalar_lea.vmem [#allocation11], %s316
        %s318 = smul.u32 28, %s24
        %s319 = smul.u32 28, %s24
        %s320 = smul.u32 28, %s24
        %s321 = ssub.s32 55, %s320
        %p322 = scmp.lt.s32.totalorder %s321, 28
        %s323 = scalar_select %p322, %s321, 28
        %s324 = smul.u32 128, %s323
        %v326 = vld [vmem:[#allocation2] sm:$0xff]
        %v327 = vld [vmem:[#allocation5] sm:$0xff]
        %v328 = vld [vmem:[#allocation5 + $0x8] sm:$0xff]
        %v329 = vld [vmem:[#allocation5 + $0x10] sm:$0xff]
        %v330 = vld [vmem:[#allocation5 + $0x18] sm:$0xff]
        %v331 = vld [vmem:[#allocation7] sm:$0x1]
        %v333 = vlaneseq
        %v334 = vshrl.u32 %v333, 7
        %v335 = vsub.s32 0, %v334
        %v336 = vrot.slane %v331, %v335
        %vm338 = vcmask 261120
        %v340 = vsel %vm338, %v326, 0
        %342 = vmatprep.subr.mxu0 0.0
        %343 = vmatpush1.msra.mxu0 %v327
        %344 = vmatprep.subr.mxu0 0.0
        %345 = vmatpush1.msra.mxu0 %v328
        %346 = vmatprep.subr.mxu0 0.0
        %347 = vmatpush1.msra.mxu0 %v329
        %348 = vmatprep.subr.mxu0 0.0
        %349 = vmatpush1.msra.mxu0 %v330
        %350 = vmatprep.subr.mxu0 0.0
        %351 = vmatpush1.msra.mxu0 0.0
        %352 = vmatprep.subr.mxu0 0.0
        %353 = vmatpush1.msra.mxu0 0.0
        %354 = vmatprep.subr.mxu0 0.0
        %355 = vmatpush1.msra.mxu0 0.0
        %356 = vmatprep.subr.mxu0 0.0
        %357 = vmatpush1.msra.mxu0 0.0
        %358 = vmatprep.subr.mxu0 0.0
        %359 = vmatpush1.msra.mxu0 0.0
        %360 = vmatprep.subr.mxu0 0.0
        %361 = vmatpush1.msra.mxu0 0.0
        %362 = vmatprep.subr.mxu0 0.0
        %363 = vmatpush1.msra.mxu0 0.0
        %364 = vmatprep.subr.mxu0 0.0
        %365 = vmatpush1.msra.mxu0 0.0
        %366 = vmatprep.subr.mxu0 0.0
        %367 = vmatpush1.msra.mxu0 0.0
        %368 = vmatprep.subr.mxu0 0.0
        %369 = vmatpush1.msra.mxu0 0.0
        %370 = vmatprep.subr.mxu0 0.0
        %371 = vmatpush1.msra.mxu0 0.0
        %372 = vmatprep.subr.mxu0 0.0
        %373 = vmatpush1.msra.mxu0 0.0
        %374 = vmatprep.subr.mxu0 0.0
        %375 = vmatpush1.msra.mxu0 0.0
        %376 = vmatprep.subr.mxu0 0.0
        %377 = vmatpush1.msra.mxu0 0.0
        %378 = vmatprep.subr.mxu0 0.0
        %379 = vmatpush1.msra.mxu0 0.0
        %380 = vmatprep.subr.mxu0 0.0
        %381 = vmatpush1.msra.mxu0 0.0
        %382 = vmatprep.subr.mxu0 0.0
        %383 = vmatpush1.msra.mxu0 0.0
        %384 = vmatprep.subr.mxu0 0.0
        %385 = vmatpush1.msra.mxu0 0.0
        %386 = vmatprep.subr.mxu0 0.0
        %387 = vmatpush1.msra.mxu0 0.0
        %388 = vmatprep.subr.mxu0 0.0
        %389 = vmatpush1.msra.mxu0 0.0
        %390 = vmatprep.subr.mxu0 0.0
        %391 = vmatpush1.msra.mxu0 0.0
        %392 = vmatprep.subr.mxu0 0.0
        %393 = vmatpush1.msra.mxu0 0.0
        %394 = vmatprep.subr.mxu0 0.0
        %395 = vmatpush1.msra.mxu0 0.0
        %396 = vmatprep.subr.mxu0 0.0
        %397 = vmatpush1.msra.mxu0 0.0
        %398 = vmatprep.subr.mxu0 0.0
        %399 = vmatpush1.msra.mxu0 0.0
        %400 = vmatprep.subr.mxu0 0.0
        %401 = vmatpush1.msra.mxu0 0.0
        %402 = vmatprep.subr.mxu0 0.0
        %403 = vmatpush1.msra.mxu0 0.0
        %404 = vmatprep.subr.mxu0 0.0
        %405 = vmatpush1.msra.mxu0 0.0
        %406 = vmatprep.mubr.f32.mxu0 0.0
        %407 = vmatmul.mubr.f32.gmra.mrb[0].mxu0 %v340
        %v408 = vpop.f32.mrb[0].mxu0
        %v409 = vadd.f32 %v336, %v408
        %v410 = vpop.f32.mrb[0].mxu0
        %411 = vdwg.mxu0
        %v412 = vmax.f32 %v409, 0.0
        %v413 = vpack.c.bf16 %v412, %v412
        %v414 = vld [vmem:[%s277] sm:$0xff]
        %v415 = vld [vmem:[%s277 + $0x8] sm:$0xff]
        %v416 = vld [vmem:[%s277 + $0x10] sm:$0xff]
        %v417 = vld [vmem:[%s277 + $0x18] sm:$0xff]
        %v418 = vld [vmem:[%s277 + $0x20] sm:$0xff]
        %v419 = vld [vmem:[%s277 + $0x28] sm:$0xff]
        %v420 = vld [vmem:[%s277 + $0x30] sm:$0xff]
        %v421 = vld [vmem:[%s277 + $0x38] sm:$0xff]
        %v422 = vld [vmem:[%s277 + $0x40] sm:$0xff]
        %v423 = vld [vmem:[%s277 + $0x48] sm:$0xff]
        %v424 = vld [vmem:[%s277 + $0x50] sm:$0xff]
        %v425 = vld [vmem:[%s277 + $0x58] sm:$0xff]
        %v426 = vld [vmem:[%s277 + $0x60] sm:$0xff]
        %v427 = vld [vmem:[%s277 + $0x68] sm:$0xff]
        %v428 = vld [vmem:[%s277 + $0x70] sm:$0xff]
        %v429 = vld [vmem:[%s277 + $0x78] sm:$0xff]
        %v430 = vld [vmem:[%s277 + $0x80] sm:$0xff]
        %v431 = vld [vmem:[%s277 + $0x88] sm:$0xff]
        %v432 = vld [vmem:[%s277 + $0x90] sm:$0xff]
        %v433 = vld [vmem:[%s277 + $0x98] sm:$0xff]
        %v434 = vld [vmem:[%s277 + $0xa0] sm:$0xff]
        %v435 = vld [vmem:[%s277 + $0xa8] sm:$0xff]
        %v436 = vld [vmem:[%s277 + $0xb0] sm:$0xff]
        %v437 = vld [vmem:[%s277 + $0xb8] sm:$0xff]
        %v438 = vld [vmem:[%s277 + $0xc0] sm:$0xff]
        %v439 = vld [vmem:[%s277 + $0xc8] sm:$0xff]
        %v440 = vld [vmem:[%s277 + $0xd0] sm:$0xff]
        %v441 = vld [vmem:[%s277 + $0xd8] sm:$0xff]
        %v442 = vld [vmem:[%s277 + $0xe0] sm:$0xff]
        %v443 = vld [vmem:[%s277 + $0xe8] sm:$0xff]
        %v444 = vld [vmem:[%s277 + $0xf0] sm:$0xff]
        %v445 = vld [vmem:[%s277 + $0xf8] sm:$0xff]
        %v446 = vld [vmem:[%s277 + $0x100] sm:$0xff]
        %v447 = vld [vmem:[%s277 + $0x108] sm:$0xff]
        %v448 = vld [vmem:[%s277 + $0x110] sm:$0xff]
        %v449 = vld [vmem:[%s277 + $0x118] sm:$0xff]
        %v450 = vld [vmem:[%s277 + $0x120] sm:$0xff]
        %v451 = vld [vmem:[%s277 + $0x128] sm:$0xff]
        %v452 = vld [vmem:[%s277 + $0x130] sm:$0xff]
        %v453 = vld [vmem:[%s277 + $0x138] sm:$0xff]
        %v454 = vld [vmem:[%s277 + $0x140] sm:$0xff]
        %v455 = vld [vmem:[%s277 + $0x148] sm:$0xff]
        %v456 = vld [vmem:[%s277 + $0x150] sm:$0xff]
        %v457 = vld [vmem:[%s277 + $0x158] sm:$0xff]
        %v458 = vld [vmem:[%s277 + $0x160] sm:$0xff]
        %v459 = vld [vmem:[%s277 + $0x168] sm:$0xff]
        %v460 = vld [vmem:[%s277 + $0x170] sm:$0xff]
        %v461 = vld [vmem:[%s277 + $0x178] sm:$0xff]
        %v462 = vld [vmem:[%s277 + $0x180] sm:$0xff]
        %v463 = vld [vmem:[%s277 + $0x188] sm:$0xff]
        %v464 = vld [vmem:[%s277 + $0x190] sm:$0xff]
        %v465 = vld [vmem:[%s277 + $0x198] sm:$0xff]
        %v466 = vld [vmem:[%s277 + $0x1a0] sm:$0xff]
        %v467 = vld [vmem:[%s277 + $0x1a8] sm:$0xff]
        %v468 = vld [vmem:[%s277 + $0x1b0] sm:$0xff]
        %v469 = vld [vmem:[%s277 + $0x1b8] sm:$0xff]
        %v470 = vld [vmem:[%s277 + $0x1c0] sm:$0xff]
        %v471 = vld [vmem:[%s277 + $0x1c8] sm:$0xff]
        %v472 = vld [vmem:[%s277 + $0x1d0] sm:$0xff]
        %v473 = vld [vmem:[%s277 + $0x1d8] sm:$0xff]
        %v474 = vld [vmem:[%s277 + $0x1e0] sm:$0xff]
        %v475 = vld [vmem:[%s277 + $0x1e8] sm:$0xff]
        %v476 = vld [vmem:[%s277 + $0x1f0] sm:$0xff]
        %v477 = vld [vmem:[%s277 + $0x1f8] sm:$0xff]
        %v478 = vld [vmem:[%s277 + $0x200] sm:$0xff]
        %v479 = vld [vmem:[%s277 + $0x208] sm:$0xff]
        %v480 = vld [vmem:[%s277 + $0x210] sm:$0xff]
        %v481 = vld [vmem:[%s277 + $0x218] sm:$0xff]
        %v482 = vld [vmem:[%s277 + $0x220] sm:$0xff]
        %v483 = vld [vmem:[%s277 + $0x228] sm:$0xff]
        %v484 = vld [vmem:[%s277 + $0x230] sm:$0xff]
        %v485 = vld [vmem:[%s277 + $0x238] sm:$0xff]
        %v486 = vld [vmem:[%s277 + $0x240] sm:$0xff]
        %v487 = vld [vmem:[%s277 + $0x248] sm:$0xff]
        %v488 = vld [vmem:[%s277 + $0x250] sm:$0xff]
        %v489 = vld [vmem:[%s277 + $0x258] sm:$0xff]
        %v490 = vld [vmem:[%s277 + $0x260] sm:$0xff]
        %v491 = vld [vmem:[%s277 + $0x268] sm:$0xff]
        %v492 = vld [vmem:[%s277 + $0x270] sm:$0xff]
        %v493 = vld [vmem:[%s277 + $0x278] sm:$0xff]
        %v494 = vld [vmem:[%s277 + $0x280] sm:$0xff]
        %v495 = vld [vmem:[%s277 + $0x288] sm:$0xff]
        %v496 = vld [vmem:[%s277 + $0x290] sm:$0xff]
        %v497 = vld [vmem:[%s277 + $0x298] sm:$0xff]
        %v498 = vld [vmem:[%s277 + $0x2a0] sm:$0xff]
        %v499 = vld [vmem:[%s277 + $0x2a8] sm:$0xff]
        %v500 = vld [vmem:[%s277 + $0x2b0] sm:$0xff]
        %v501 = vld [vmem:[%s277 + $0x2b8] sm:$0xff]
        %v502 = vld [vmem:[%s277 + $0x2c0] sm:$0xff]
        %v503 = vld [vmem:[%s277 + $0x2c8] sm:$0xff]
        %v504 = vld [vmem:[%s277 + $0x2d0] sm:$0xff]
        %v505 = vld [vmem:[%s277 + $0x2d8] sm:$0xff]
        %v506 = vld [vmem:[%s277 + $0x2e0] sm:$0xff]
        %v507 = vld [vmem:[%s277 + $0x2e8] sm:$0xff]
        %v508 = vld [vmem:[%s277 + $0x2f0] sm:$0xff]
        %v509 = vld [vmem:[%s277 + $0x2f8] sm:$0xff]
        %v510 = vld [vmem:[%s277 + $0x300] sm:$0xff]
        %v511 = vld [vmem:[%s277 + $0x308] sm:$0xff]
        %v512 = vld [vmem:[%s277 + $0x310] sm:$0xff]
        %v513 = vld [vmem:[%s277 + $0x318] sm:$0xff]
        %v514 = vld [vmem:[%s277 + $0x320] sm:$0xff]
        %v515 = vld [vmem:[%s277 + $0x328] sm:$0xff]
        %v516 = vld [vmem:[%s277 + $0x330] sm:$0xff]
        %v517 = vld [vmem:[%s277 + $0x338] sm:$0xff]
        %v518 = vld [vmem:[%s277 + $0x340] sm:$0xff]
        %v519 = vld [vmem:[%s277 + $0x348] sm:$0xff]
        %v520 = vld [vmem:[%s277 + $0x350] sm:$0xff]
        %v521 = vld [vmem:[%s277 + $0x358] sm:$0xff]
        %v522 = vld [vmem:[%s277 + $0x360] sm:$0xff]
        %v523 = vld [vmem:[%s277 + $0x368] sm:$0xff]
        %v524 = vld [vmem:[%s277 + $0x370] sm:$0xff]
        %v525 = vld [vmem:[%s277 + $0x378] sm:$0xff]
        %v526 = vld [vmem:[%s277 + $0x380] sm:$0xff]
        %v527 = vld [vmem:[%s277 + $0x388] sm:$0xff]
        %v528 = vld [vmem:[%s277 + $0x390] sm:$0xff]
        %v529 = vld [vmem:[%s277 + $0x398] sm:$0xff]
        %v530 = vld [vmem:[%s277 + $0x3a0] sm:$0xff]
        %v531 = vld [vmem:[%s277 + $0x3a8] sm:$0xff]
        %v532 = vld [vmem:[%s277 + $0x3b0] sm:$0xff]
        %v533 = vld [vmem:[%s277 + $0x3b8] sm:$0xff]
        %v534 = vld [vmem:[%s277 + $0x3c0] sm:$0xff]
        %v535 = vld [vmem:[%s277 + $0x3c8] sm:$0xff]
        %v536 = vld [vmem:[%s277 + $0x3d0] sm:$0xff]
        %v537 = vld [vmem:[%s277 + $0x3d8] sm:$0xff]
        %v538 = vld [vmem:[%s277 + $0x3e0] sm:$0xff]
        %v539 = vld [vmem:[%s277 + $0x3e8] sm:$0xff]
        %v540 = vld [vmem:[%s277 + $0x3f0] sm:$0xff]
        %v541 = vld [vmem:[%s277 + $0x3f8] sm:$0xff]
        %v542 = vld [vmem:[%s277 + $0x400] sm:$0xff]
        %v543 = vld [vmem:[%s277 + $0x408] sm:$0xff]
        %v544 = vld [vmem:[%s277 + $0x410] sm:$0xff]
        %v545 = vld [vmem:[%s277 + $0x418] sm:$0xff]
        %v546 = vld [vmem:[%s277 + $0x420] sm:$0xff]
        %v547 = vld [vmem:[%s277 + $0x428] sm:$0xff]
        %v548 = vld [vmem:[%s277 + $0x430] sm:$0xff]
        %v549 = vld [vmem:[%s277 + $0x438] sm:$0xff]
        %v550 = vld [vmem:[%s277 + $0x440] sm:$0xff]
        %v551 = vld [vmem:[%s277 + $0x448] sm:$0xff]
        %v552 = vld [vmem:[%s277 + $0x450] sm:$0xff]
        %v553 = vld [vmem:[%s277 + $0x458] sm:$0xff]
        %v554 = vld [vmem:[%s277 + $0x460] sm:$0xff]
        %v555 = vld [vmem:[%s277 + $0x468] sm:$0xff]
        %v556 = vld [vmem:[%s277 + $0x470] sm:$0xff]
        %v557 = vld [vmem:[%s277 + $0x478] sm:$0xff]
        %v558 = vld [vmem:[%s277 + $0x480] sm:$0xff]
        %v559 = vld [vmem:[%s277 + $0x488] sm:$0xff]
        %v560 = vld [vmem:[%s277 + $0x490] sm:$0xff]
        %v561 = vld [vmem:[%s277 + $0x498] sm:$0xff]
        %v562 = vld [vmem:[%s277 + $0x4a0] sm:$0xff]
        %v563 = vld [vmem:[%s277 + $0x4a8] sm:$0xff]
        %v564 = vld [vmem:[%s277 + $0x4b0] sm:$0xff]
        %v565 = vld [vmem:[%s277 + $0x4b8] sm:$0xff]
        %v566 = vld [vmem:[%s277 + $0x4c0] sm:$0xff]
        %v567 = vld [vmem:[%s277 + $0x4c8] sm:$0xff]
        %v568 = vld [vmem:[%s277 + $0x4d0] sm:$0xff]
        %v569 = vld [vmem:[%s277 + $0x4d8] sm:$0xff]
        %v570 = vld [vmem:[%s277 + $0x4e0] sm:$0xff]
        %v571 = vld [vmem:[%s277 + $0x4e8] sm:$0xff]
        %v572 = vld [vmem:[%s277 + $0x4f0] sm:$0xff]
        %v573 = vld [vmem:[%s277 + $0x4f8] sm:$0xff]
        %v574 = vld [vmem:[%s277 + $0x500] sm:$0xff]
        %v575 = vld [vmem:[%s277 + $0x508] sm:$0xff]
        %v576 = vld [vmem:[%s277 + $0x510] sm:$0xff]
        %v577 = vld [vmem:[%s277 + $0x518] sm:$0xff]
        %v578 = vld [vmem:[%s277 + $0x520] sm:$0xff]
        %v579 = vld [vmem:[%s277 + $0x528] sm:$0xff]
        %v580 = vld [vmem:[%s277 + $0x530] sm:$0xff]
        %v581 = vld [vmem:[%s277 + $0x538] sm:$0xff]
        %v582 = vld [vmem:[%s277 + $0x540] sm:$0xff]
        %v583 = vld [vmem:[%s277 + $0x548] sm:$0xff]
        %v584 = vld [vmem:[%s277 + $0x550] sm:$0xff]
        %v585 = vld [vmem:[%s277 + $0x558] sm:$0xff]
        %v586 = vld [vmem:[%s277 + $0x560] sm:$0xff]
        %v587 = vld [vmem:[%s277 + $0x568] sm:$0xff]
        %v588 = vld [vmem:[%s277 + $0x570] sm:$0xff]
        %v589 = vld [vmem:[%s277 + $0x578] sm:$0xff]
        %v590 = vld [vmem:[%s277 + $0x580] sm:$0xff]
        %v591 = vld [vmem:[%s277 + $0x588] sm:$0xff]
        %v592 = vld [vmem:[%s277 + $0x590] sm:$0xff]
        %v593 = vld [vmem:[%s277 + $0x598] sm:$0xff]
        %v594 = vld [vmem:[%s277 + $0x5a0] sm:$0xff]
        %v595 = vld [vmem:[%s277 + $0x5a8] sm:$0xff]
        %v596 = vld [vmem:[%s277 + $0x5b0] sm:$0xff]
        %v597 = vld [vmem:[%s277 + $0x5b8] sm:$0xff]
        %v598 = vld [vmem:[%s277 + $0x5c0] sm:$0xff]
        %v599 = vld [vmem:[%s277 + $0x5c8] sm:$0xff]
        %v600 = vld [vmem:[%s277 + $0x5d0] sm:$0xff]
        %v601 = vld [vmem:[%s277 + $0x5d8] sm:$0xff]
        %v602 = vld [vmem:[%s277 + $0x5e0] sm:$0xff]
        %v603 = vld [vmem:[%s277 + $0x5e8] sm:$0xff]
        %v604 = vld [vmem:[%s277 + $0x5f0] sm:$0xff]
        %v605 = vld [vmem:[%s277 + $0x5f8] sm:$0xff]
        %v606 = vld [vmem:[%s277 + $0x600] sm:$0xff]
        %v607 = vld [vmem:[%s277 + $0x608] sm:$0xff]
        %v608 = vld [vmem:[%s277 + $0x610] sm:$0xff]
        %v609 = vld [vmem:[%s277 + $0x618] sm:$0xff]
        %v610 = vld [vmem:[%s277 + $0x620] sm:$0xff]
        %v611 = vld [vmem:[%s277 + $0x628] sm:$0xff]
        %v612 = vld [vmem:[%s277 + $0x630] sm:$0xff]
        %v613 = vld [vmem:[%s277 + $0x638] sm:$0xff]
        %v614 = vld [vmem:[%s277 + $0x640] sm:$0xff]
        %v615 = vld [vmem:[%s277 + $0x648] sm:$0xff]
        %v616 = vld [vmem:[%s277 + $0x650] sm:$0xff]
        %v617 = vld [vmem:[%s277 + $0x658] sm:$0xff]
        %v618 = vld [vmem:[%s277 + $0x660] sm:$0xff]
        %v619 = vld [vmem:[%s277 + $0x668] sm:$0xff]
        %v620 = vld [vmem:[%s277 + $0x670] sm:$0xff]
        %v621 = vld [vmem:[%s277 + $0x678] sm:$0xff]
        %v622 = vld [vmem:[%s277 + $0x680] sm:$0xff]
        %v623 = vld [vmem:[%s277 + $0x688] sm:$0xff]
        %v624 = vld [vmem:[%s277 + $0x690] sm:$0xff]
        %v625 = vld [vmem:[%s277 + $0x698] sm:$0xff]
        %v626 = vld [vmem:[%s277 + $0x6a0] sm:$0xff]
        %v627 = vld [vmem:[%s277 + $0x6a8] sm:$0xff]
        %v628 = vld [vmem:[%s277 + $0x6b0] sm:$0xff]
        %v629 = vld [vmem:[%s277 + $0x6b8] sm:$0xff]
        %v630 = vld [vmem:[%s277 + $0x6c0] sm:$0xff]
        %v631 = vld [vmem:[%s277 + $0x6c8] sm:$0xff]
        %v632 = vld [vmem:[%s277 + $0x6d0] sm:$0xff]
        %v633 = vld [vmem:[%s277 + $0x6d8] sm:$0xff]
        %v634 = vld [vmem:[%s277 + $0x6e0] sm:$0xff]
        %v635 = vld [vmem:[%s277 + $0x6e8] sm:$0xff]
        %v636 = vld [vmem:[%s277 + $0x6f0] sm:$0xff]
        %v637 = vld [vmem:[%s277 + $0x6f8] sm:$0xff]
        %v638 = vld [vmem:[%s286] sm:$0xff]
        %v639 = vld [vmem:[%s286 + $0x8] sm:$0xff]
        %v640 = vld [vmem:[%s286 + $0x10] sm:$0xff]
        %v641 = vld [vmem:[%s286 + $0x18] sm:$0xf]
        %v646 = vlaneseq
        %v647 = vshrl.u32 %v646, 7
        %v648 = vsub.s32 0, %v647
        %v649 = vrot.slane %v638, %v648
        %v650 = vlaneseq
        %v651 = vshrl.u32 %v650, 7
        %v652 = vsub.s32 1, %v651
        %v653 = vrot.slane %v638, %v652
        %v654 = vlaneseq
        %v655 = vshrl.u32 %v654, 7
        %v656 = vsub.s32 2, %v655
        %v657 = vrot.slane %v638, %v656
        %v658 = vlaneseq
        %v659 = vshrl.u32 %v658, 7
        %v660 = vsub.s32 3, %v659
        %v661 = vrot.slane %v638, %v660
        %v662 = vlaneseq
        %v663 = vshrl.u32 %v662, 7
        %v664 = vsub.s32 4, %v663
        %v665 = vrot.slane %v638, %v664
        %v666 = vlaneseq
        %v667 = vshrl.u32 %v666, 7
        %v668 = vsub.s32 5, %v667
        %v669 = vrot.slane %v638, %v668
        %v670 = vlaneseq
        %v671 = vshrl.u32 %v670, 7
        %v672 = vsub.s32 6, %v671
        %v673 = vrot.slane %v638, %v672
        %v674 = vlaneseq
        %v675 = vshrl.u32 %v674, 7
        %v676 = vsub.s32 7, %v675
        %v677 = vrot.slane %v638, %v676
        %v678 = vlaneseq
        %v679 = vshrl.u32 %v678, 7
        %v680 = vsub.s32 0, %v679
        %v681 = vrot.slane %v639, %v680
        %v682 = vlaneseq
        %v683 = vshrl.u32 %v682, 7
        %v684 = vsub.s32 1, %v683
        %v685 = vrot.slane %v639, %v684
        %v686 = vlaneseq
        %v687 = vshrl.u32 %v686, 7
        %v688 = vsub.s32 2, %v687
        %v689 = vrot.slane %v639, %v688
        %v690 = vlaneseq
        %v691 = vshrl.u32 %v690, 7
        %v692 = vsub.s32 3, %v691
        %v693 = vrot.slane %v639, %v692
        %v694 = vlaneseq
        %v695 = vshrl.u32 %v694, 7
        %v696 = vsub.s32 4, %v695
        %v697 = vrot.slane %v639, %v696
        %v698 = vlaneseq
        %v699 = vshrl.u32 %v698, 7
        %v700 = vsub.s32 5, %v699
        %v701 = vrot.slane %v639, %v700
        %v702 = vlaneseq
        %v703 = vshrl.u32 %v702, 7
        %v704 = vsub.s32 6, %v703
        %v705 = vrot.slane %v639, %v704
        %v706 = vlaneseq
        %v707 = vshrl.u32 %v706, 7
        %v708 = vsub.s32 7, %v707
        %v709 = vrot.slane %v639, %v708
        %v710 = vlaneseq
        %v711 = vshrl.u32 %v710, 7
        %v712 = vsub.s32 0, %v711
        %v713 = vrot.slane %v640, %v712
        %v714 = vlaneseq
        %v715 = vshrl.u32 %v714, 7
        %v716 = vsub.s32 1, %v715
        %v717 = vrot.slane %v640, %v716
        %v718 = vlaneseq
        %v719 = vshrl.u32 %v718, 7
        %v720 = vsub.s32 2, %v719
        %v721 = vrot.slane %v640, %v720
        %v722 = vlaneseq
        %v723 = vshrl.u32 %v722, 7
        %v724 = vsub.s32 3, %v723
        %v725 = vrot.slane %v640, %v724
        %v726 = vlaneseq
        %v727 = vshrl.u32 %v726, 7
        %v728 = vsub.s32 4, %v727
        %v729 = vrot.slane %v640, %v728
        %v730 = vlaneseq
        %v731 = vshrl.u32 %v730, 7
        %v732 = vsub.s32 5, %v731
        %v733 = vrot.slane %v640, %v732
        %v734 = vlaneseq
        %v735 = vshrl.u32 %v734, 7
        %v736 = vsub.s32 6, %v735
        %v737 = vrot.slane %v640, %v736
        %v738 = vlaneseq
        %v739 = vshrl.u32 %v738, 7
        %v740 = vsub.s32 7, %v739
        %v741 = vrot.slane %v640, %v740
        %v742 = vlaneseq
        %v743 = vshrl.u32 %v742, 7
        %v744 = vsub.s32 0, %v743
        %v745 = vrot.slane %v641, %v744
        %v746 = vlaneseq
        %v747 = vshrl.u32 %v746, 7
        %v748 = vsub.s32 1, %v747
        %v749 = vrot.slane %v641, %v748
        %v750 = vlaneseq
        %v751 = vshrl.u32 %v750, 7
        %v752 = vsub.s32 2, %v751
        %v753 = vrot.slane %v641, %v752
        %v754 = vlaneseq
        %v755 = vshrl.u32 %v754, 7
        %v756 = vsub.s32 3, %v755
        %v757 = vrot.slane %v641, %v756
        %v1010 = vunpack.c.l.b16 %v414
        %v1011 = vunpack.c.h.b16 %v414
        %v1012 = vunpack.c.l.b16 %v415
        %v1013 = vunpack.c.h.b16 %v415
        %v1014 = vunpack.c.l.b16 %v416
        %v1015 = vunpack.c.h.b16 %v416
        %v1016 = vunpack.c.l.b16 %v417
        %v1017 = vunpack.c.h.b16 %v417
        %v1018 = vunpack.c.l.b16 %v418
        %v1019 = vunpack.c.h.b16 %v418
        %v1020 = vunpack.c.l.b16 %v419
        %v1021 = vunpack.c.h.b16 %v419
        %v1022 = vunpack.c.l.b16 %v420
        %v1023 = vunpack.c.h.b16 %v420
        %v1024 = vunpack.c.l.b16 %v421
        %v1025 = vunpack.c.h.b16 %v421
        %v1026 = vunpack.c.l.b16 %v422
        %v1027 = vunpack.c.h.b16 %v422
        %v1028 = vunpack.c.l.b16 %v423
        %v1029 = vunpack.c.h.b16 %v423
        %v1030 = vunpack.c.l.b16 %v424
        %v1031 = vunpack.c.h.b16 %v424
        %v1032 = vunpack.c.l.b16 %v425
        %v1033 = vunpack.c.h.b16 %v425
        %v1034 = vunpack.c.l.b16 %v426
        %v1035 = vunpack.c.h.b16 %v426
        %v1036 = vunpack.c.l.b16 %v427
        %v1037 = vunpack.c.h.b16 %v427
        %v1038 = vunpack.c.l.b16 %v428
        %v1039 = vunpack.c.h.b16 %v428
        %v1040 = vunpack.c.l.b16 %v429
        %v1041 = vunpack.c.h.b16 %v429
        %v1042 = vunpack.c.l.b16 %v430
        %v1043 = vunpack.c.h.b16 %v430
        %v1044 = vunpack.c.l.b16 %v431
        %v1045 = vunpack.c.h.b16 %v431
        %v1046 = vunpack.c.l.b16 %v432
        %v1047 = vunpack.c.h.b16 %v432
        %v1048 = vunpack.c.l.b16 %v433
        %v1049 = vunpack.c.h.b16 %v433
        %v1050 = vunpack.c.l.b16 %v434
        %v1051 = vunpack.c.h.b16 %v434
        %v1052 = vunpack.c.l.b16 %v435
        %v1053 = vunpack.c.h.b16 %v435
        %v1054 = vunpack.c.l.b16 %v436
        %v1055 = vunpack.c.h.b16 %v436
        %v1056 = vunpack.c.l.b16 %v437
        %v1057 = vunpack.c.h.b16 %v437
        %v1058 = vunpack.c.l.b16 %v438
        %v1059 = vunpack.c.h.b16 %v438
        %v1060 = vunpack.c.l.b16 %v439
        %v1061 = vunpack.c.h.b16 %v439
        %v1062 = vunpack.c.l.b16 %v440
        %v1063 = vunpack.c.h.b16 %v440
        %v1064 = vunpack.c.l.b16 %v441
        %v1065 = vunpack.c.h.b16 %v441
        %v1066 = vunpack.c.l.b16 %v442
        %v1067 = vunpack.c.h.b16 %v442
        %v1068 = vunpack.c.l.b16 %v443
        %v1069 = vunpack.c.h.b16 %v443
        %v1070 = vunpack.c.l.b16 %v444
        %v1071 = vunpack.c.h.b16 %v444
        %v1072 = vunpack.c.l.b16 %v445
        %v1073 = vunpack.c.h.b16 %v445
        %v1074 = vunpack.c.l.b16 %v446
        %v1075 = vunpack.c.h.b16 %v446
        %v1076 = vunpack.c.l.b16 %v447
        %v1077 = vunpack.c.h.b16 %v447
        %v1078 = vunpack.c.l.b16 %v448
        %v1079 = vunpack.c.h.b16 %v448
        %v1080 = vunpack.c.l.b16 %v449
        %v1081 = vunpack.c.h.b16 %v449
        %v1082 = vunpack.c.l.b16 %v450
        %v1083 = vunpack.c.h.b16 %v450
        %v1084 = vunpack.c.l.b16 %v451
        %v1085 = vunpack.c.h.b16 %v451
        %v1086 = vunpack.c.l.b16 %v452
        %v1087 = vunpack.c.h.b16 %v452
        %v1088 = vunpack.c.l.b16 %v453
        %v1089 = vunpack.c.h.b16 %v453
        %v1090 = vunpack.c.l.b16 %v454
        %v1091 = vunpack.c.h.b16 %v454
        %v1092 = vunpack.c.l.b16 %v455
        %v1093 = vunpack.c.h.b16 %v455
        %v1094 = vunpack.c.l.b16 %v456
        %v1095 = vunpack.c.h.b16 %v456
        %v1096 = vunpack.c.l.b16 %v457
        %v1097 = vunpack.c.h.b16 %v457
        %v1098 = vunpack.c.l.b16 %v458
        %v1099 = vunpack.c.h.b16 %v458
        %v1100 = vunpack.c.l.b16 %v459
        %v1101 = vunpack.c.h.b16 %v459
        %v1102 = vunpack.c.l.b16 %v460
        %v1103 = vunpack.c.h.b16 %v460
        %v1104 = vunpack.c.l.b16 %v461
        %v1105 = vunpack.c.h.b16 %v461
        %v1106 = vunpack.c.l.b16 %v462
        %v1107 = vunpack.c.h.b16 %v462
        %v1108 = vunpack.c.l.b16 %v463
        %v1109 = vunpack.c.h.b16 %v463
        %v1110 = vunpack.c.l.b16 %v464
        %v1111 = vunpack.c.h.b16 %v464
        %v1112 = vunpack.c.l.b16 %v465
        %v1113 = vunpack.c.h.b16 %v465
        %v1114 = vunpack.c.l.b16 %v466
        %v1115 = vunpack.c.h.b16 %v466
        %v1116 = vunpack.c.l.b16 %v467
        %v1117 = vunpack.c.h.b16 %v467
        %v1118 = vunpack.c.l.b16 %v468
        %v1119 = vunpack.c.h.b16 %v468
        %v1120 = vunpack.c.l.b16 %v469
        %v1121 = vunpack.c.h.b16 %v469
        %v1122 = vunpack.c.l.b16 %v470
        %v1123 = vunpack.c.h.b16 %v470
        %v1124 = vunpack.c.l.b16 %v471
        %v1125 = vunpack.c.h.b16 %v471
        %v1126 = vunpack.c.l.b16 %v472
        %v1127 = vunpack.c.h.b16 %v472
        %v1128 = vunpack.c.l.b16 %v473
        %v1129 = vunpack.c.h.b16 %v473
        %v1130 = vunpack.c.l.b16 %v474
        %v1131 = vunpack.c.h.b16 %v474
        %v1132 = vunpack.c.l.b16 %v475
        %v1133 = vunpack.c.h.b16 %v475
        %v1134 = vunpack.c.l.b16 %v476
        %v1135 = vunpack.c.h.b16 %v476
        %v1136 = vunpack.c.l.b16 %v477
        %v1137 = vunpack.c.h.b16 %v477
        %v1138 = vunpack.c.l.b16 %v478
        %v1139 = vunpack.c.h.b16 %v478
        %v1140 = vunpack.c.l.b16 %v479
        %v1141 = vunpack.c.h.b16 %v479
        %v1142 = vunpack.c.l.b16 %v480
        %v1143 = vunpack.c.h.b16 %v480
        %v1144 = vunpack.c.l.b16 %v481
        %v1145 = vunpack.c.h.b16 %v481
        %v1146 = vunpack.c.l.b16 %v482
        %v1147 = vunpack.c.h.b16 %v482
        %v1148 = vunpack.c.l.b16 %v483
        %v1149 = vunpack.c.h.b16 %v483
        %v1150 = vunpack.c.l.b16 %v484
        %v1151 = vunpack.c.h.b16 %v484
        %v1152 = vunpack.c.l.b16 %v485
        %v1153 = vunpack.c.h.b16 %v485
        %v1154 = vunpack.c.l.b16 %v486
        %v1155 = vunpack.c.h.b16 %v486
        %v1156 = vunpack.c.l.b16 %v487
        %v1157 = vunpack.c.h.b16 %v487
        %v1158 = vunpack.c.l.b16 %v488
        %v1159 = vunpack.c.h.b16 %v488
        %v1160 = vunpack.c.l.b16 %v489
        %v1161 = vunpack.c.h.b16 %v489
        %v1162 = vunpack.c.l.b16 %v490
        %v1163 = vunpack.c.h.b16 %v490
        %v1164 = vunpack.c.l.b16 %v491
        %v1165 = vunpack.c.h.b16 %v491
        %v1166 = vunpack.c.l.b16 %v492
        %v1167 = vunpack.c.h.b16 %v492
        %v1168 = vunpack.c.l.b16 %v493
        %v1169 = vunpack.c.h.b16 %v493
        %v1170 = vunpack.c.l.b16 %v494
        %v1171 = vunpack.c.h.b16 %v494
        %v1172 = vunpack.c.l.b16 %v495
        %v1173 = vunpack.c.h.b16 %v495
        %v1174 = vunpack.c.l.b16 %v496
        %v1175 = vunpack.c.h.b16 %v496
        %v1176 = vunpack.c.l.b16 %v497
        %v1177 = vunpack.c.h.b16 %v497
        %v1178 = vunpack.c.l.b16 %v498
        %v1179 = vunpack.c.h.b16 %v498
        %v1180 = vunpack.c.l.b16 %v499
        %v1181 = vunpack.c.h.b16 %v499
        %v1182 = vunpack.c.l.b16 %v500
        %v1183 = vunpack.c.h.b16 %v500
        %v1184 = vunpack.c.l.b16 %v501
        %v1185 = vunpack.c.h.b16 %v501
        %v1186 = vunpack.c.l.b16 %v502
        %v1187 = vunpack.c.h.b16 %v502
        %v1188 = vunpack.c.l.b16 %v503
        %v1189 = vunpack.c.h.b16 %v503
        %v1190 = vunpack.c.l.b16 %v504
        %v1191 = vunpack.c.h.b16 %v504
        %v1192 = vunpack.c.l.b16 %v505
        %v1193 = vunpack.c.h.b16 %v505
        %v1194 = vunpack.c.l.b16 %v506
        %v1195 = vunpack.c.h.b16 %v506
        %v1196 = vunpack.c.l.b16 %v507
        %v1197 = vunpack.c.h.b16 %v507
        %v1198 = vunpack.c.l.b16 %v508
        %v1199 = vunpack.c.h.b16 %v508
        %v1200 = vunpack.c.l.b16 %v509
        %v1201 = vunpack.c.h.b16 %v509
        %v1202 = vunpack.c.l.b16 %v510
        %v1203 = vunpack.c.h.b16 %v510
        %v1204 = vunpack.c.l.b16 %v511
        %v1205 = vunpack.c.h.b16 %v511
        %v1206 = vunpack.c.l.b16 %v512
        %v1207 = vunpack.c.h.b16 %v512
        %v1208 = vunpack.c.l.b16 %v513
        %v1209 = vunpack.c.h.b16 %v513
        %v1210 = vunpack.c.l.b16 %v514
        %v1211 = vunpack.c.h.b16 %v514
        %v1212 = vunpack.c.l.b16 %v515
        %v1213 = vunpack.c.h.b16 %v515
        %v1214 = vunpack.c.l.b16 %v516
        %v1215 = vunpack.c.h.b16 %v516
        %v1216 = vunpack.c.l.b16 %v517
        %v1217 = vunpack.c.h.b16 %v517
        %v1218 = vunpack.c.l.b16 %v518
        %v1219 = vunpack.c.h.b16 %v518
        %v1220 = vunpack.c.l.b16 %v519
        %v1221 = vunpack.c.h.b16 %v519
        %v1222 = vunpack.c.l.b16 %v520
        %v1223 = vunpack.c.h.b16 %v520
        %v1224 = vunpack.c.l.b16 %v521
        %v1225 = vunpack.c.h.b16 %v521
        %v1226 = vunpack.c.l.b16 %v522
        %v1227 = vunpack.c.h.b16 %v522
        %v1228 = vunpack.c.l.b16 %v523
        %v1229 = vunpack.c.h.b16 %v523
        %v1230 = vunpack.c.l.b16 %v524
        %v1231 = vunpack.c.h.b16 %v524
        %v1232 = vunpack.c.l.b16 %v525
        %v1233 = vunpack.c.h.b16 %v525
        %v1234 = vunpack.c.l.b16 %v526
        %v1235 = vunpack.c.h.b16 %v526
        %v1236 = vunpack.c.l.b16 %v527
        %v1237 = vunpack.c.h.b16 %v527
        %v1238 = vunpack.c.l.b16 %v528
        %v1239 = vunpack.c.h.b16 %v528
        %v1240 = vunpack.c.l.b16 %v529
        %v1241 = vunpack.c.h.b16 %v529
        %v1242 = vunpack.c.l.b16 %v530
        %v1243 = vunpack.c.h.b16 %v530
        %v1244 = vunpack.c.l.b16 %v531
        %v1245 = vunpack.c.h.b16 %v531
        %v1246 = vunpack.c.l.b16 %v532
        %v1247 = vunpack.c.h.b16 %v532
        %v1248 = vunpack.c.l.b16 %v533
        %v1249 = vunpack.c.h.b16 %v533
        %v1250 = vunpack.c.l.b16 %v534
        %v1251 = vunpack.c.h.b16 %v534
        %v1252 = vunpack.c.l.b16 %v535
        %v1253 = vunpack.c.h.b16 %v535
        %v1254 = vunpack.c.l.b16 %v536
        %v1255 = vunpack.c.h.b16 %v536
        %v1256 = vunpack.c.l.b16 %v537
        %v1257 = vunpack.c.h.b16 %v537
        %v1258 = vunpack.c.l.b16 %v538
        %v1259 = vunpack.c.h.b16 %v538
        %v1260 = vunpack.c.l.b16 %v539
        %v1261 = vunpack.c.h.b16 %v539
        %v1262 = vunpack.c.l.b16 %v540
        %v1263 = vunpack.c.h.b16 %v540
        %v1264 = vunpack.c.l.b16 %v541
        %v1265 = vunpack.c.h.b16 %v541
        %v1266 = vunpack.c.l.b16 %v542
        %v1267 = vunpack.c.h.b16 %v542
        %v1268 = vunpack.c.l.b16 %v543
        %v1269 = vunpack.c.h.b16 %v543
        %v1270 = vunpack.c.l.b16 %v544
        %v1271 = vunpack.c.h.b16 %v544
        %v1272 = vunpack.c.l.b16 %v545
        %v1273 = vunpack.c.h.b16 %v545
        %v1274 = vunpack.c.l.b16 %v546
        %v1275 = vunpack.c.h.b16 %v546
        %v1276 = vunpack.c.l.b16 %v547
        %v1277 = vunpack.c.h.b16 %v547
        %v1278 = vunpack.c.l.b16 %v548
        %v1279 = vunpack.c.h.b16 %v548
        %v1280 = vunpack.c.l.b16 %v549
        %v1281 = vunpack.c.h.b16 %v549
        %v1282 = vunpack.c.l.b16 %v550
        %v1283 = vunpack.c.h.b16 %v550
        %v1284 = vunpack.c.l.b16 %v551
        %v1285 = vunpack.c.h.b16 %v551
        %v1286 = vunpack.c.l.b16 %v552
        %v1287 = vunpack.c.h.b16 %v552
        %v1288 = vunpack.c.l.b16 %v553
        %v1289 = vunpack.c.h.b16 %v553
        %v1290 = vunpack.c.l.b16 %v554
        %v1291 = vunpack.c.h.b16 %v554
        %v1292 = vunpack.c.l.b16 %v555
        %v1293 = vunpack.c.h.b16 %v555
        %v1294 = vunpack.c.l.b16 %v556
        %v1295 = vunpack.c.h.b16 %v556
        %v1296 = vunpack.c.l.b16 %v557
        %v1297 = vunpack.c.h.b16 %v557
        %v1298 = vunpack.c.l.b16 %v558
        %v1299 = vunpack.c.h.b16 %v558
        %v1300 = vunpack.c.l.b16 %v559
        %v1301 = vunpack.c.h.b16 %v559
        %v1302 = vunpack.c.l.b16 %v560
        %v1303 = vunpack.c.h.b16 %v560
        %v1304 = vunpack.c.l.b16 %v561
        %v1305 = vunpack.c.h.b16 %v561
        %v1306 = vunpack.c.l.b16 %v562
        %v1307 = vunpack.c.h.b16 %v562
        %v1308 = vunpack.c.l.b16 %v563
        %v1309 = vunpack.c.h.b16 %v563
        %v1310 = vunpack.c.l.b16 %v564
        %v1311 = vunpack.c.h.b16 %v564
        %v1312 = vunpack.c.l.b16 %v565
        %v1313 = vunpack.c.h.b16 %v565
        %v1314 = vunpack.c.l.b16 %v566
        %v1315 = vunpack.c.h.b16 %v566
        %v1316 = vunpack.c.l.b16 %v567
        %v1317 = vunpack.c.h.b16 %v567
        %v1318 = vunpack.c.l.b16 %v568
        %v1319 = vunpack.c.h.b16 %v568
        %v1320 = vunpack.c.l.b16 %v569
        %v1321 = vunpack.c.h.b16 %v569
        %v1322 = vunpack.c.l.b16 %v570
        %v1323 = vunpack.c.h.b16 %v570
        %v1324 = vunpack.c.l.b16 %v571
        %v1325 = vunpack.c.h.b16 %v571
        %v1326 = vunpack.c.l.b16 %v572
        %v1327 = vunpack.c.h.b16 %v572
        %v1328 = vunpack.c.l.b16 %v573
        %v1329 = vunpack.c.h.b16 %v573
        %v1330 = vunpack.c.l.b16 %v574
        %v1331 = vunpack.c.h.b16 %v574
        %v1332 = vunpack.c.l.b16 %v575
        %v1333 = vunpack.c.h.b16 %v575
        %v1334 = vunpack.c.l.b16 %v576
        %v1335 = vunpack.c.h.b16 %v576
        %v1336 = vunpack.c.l.b16 %v577
        %v1337 = vunpack.c.h.b16 %v577
        %v1338 = vunpack.c.l.b16 %v578
        %v1339 = vunpack.c.h.b16 %v578
        %v1340 = vunpack.c.l.b16 %v579
        %v1341 = vunpack.c.h.b16 %v579
        %v1342 = vunpack.c.l.b16 %v580
        %v1343 = vunpack.c.h.b16 %v580
        %v1344 = vunpack.c.l.b16 %v581
        %v1345 = vunpack.c.h.b16 %v581
        %v1346 = vunpack.c.l.b16 %v582
        %v1347 = vunpack.c.h.b16 %v582
        %v1348 = vunpack.c.l.b16 %v583
        %v1349 = vunpack.c.h.b16 %v583
        %v1350 = vunpack.c.l.b16 %v584
        %v1351 = vunpack.c.h.b16 %v584
        %v1352 = vunpack.c.l.b16 %v585
        %v1353 = vunpack.c.h.b16 %v585
        %v1354 = vunpack.c.l.b16 %v586
        %v1355 = vunpack.c.h.b16 %v586
        %v1356 = vunpack.c.l.b16 %v587
        %v1357 = vunpack.c.h.b16 %v587
        %v1358 = vunpack.c.l.b16 %v588
        %v1359 = vunpack.c.h.b16 %v588
        %v1360 = vunpack.c.l.b16 %v589
        %v1361 = vunpack.c.h.b16 %v589
        %v1362 = vunpack.c.l.b16 %v590
        %v1363 = vunpack.c.h.b16 %v590
        %v1364 = vunpack.c.l.b16 %v591
        %v1365 = vunpack.c.h.b16 %v591
        %v1366 = vunpack.c.l.b16 %v592
        %v1367 = vunpack.c.h.b16 %v592
        %v1368 = vunpack.c.l.b16 %v593
        %v1369 = vunpack.c.h.b16 %v593
        %v1370 = vunpack.c.l.b16 %v594
        %v1371 = vunpack.c.h.b16 %v594
        %v1372 = vunpack.c.l.b16 %v595
        %v1373 = vunpack.c.h.b16 %v595
        %v1374 = vunpack.c.l.b16 %v596
        %v1375 = vunpack.c.h.b16 %v596
        %v1376 = vunpack.c.l.b16 %v597
        %v1377 = vunpack.c.h.b16 %v597
        %v1378 = vunpack.c.l.b16 %v598
        %v1379 = vunpack.c.h.b16 %v598
        %v1380 = vunpack.c.l.b16 %v599
        %v1381 = vunpack.c.h.b16 %v599
        %v1382 = vunpack.c.l.b16 %v600
        %v1383 = vunpack.c.h.b16 %v600
        %v1384 = vunpack.c.l.b16 %v601
        %v1385 = vunpack.c.h.b16 %v601
        %v1386 = vunpack.c.l.b16 %v602
        %v1387 = vunpack.c.h.b16 %v602
        %v1388 = vunpack.c.l.b16 %v603
        %v1389 = vunpack.c.h.b16 %v603
        %v1390 = vunpack.c.l.b16 %v604
        %v1391 = vunpack.c.h.b16 %v604
        %v1392 = vunpack.c.l.b16 %v605
        %v1393 = vunpack.c.h.b16 %v605
        %v1394 = vunpack.c.l.b16 %v606
        %v1395 = vunpack.c.h.b16 %v606
        %v1396 = vunpack.c.l.b16 %v607
        %v1397 = vunpack.c.h.b16 %v607
        %v1398 = vunpack.c.l.b16 %v608
        %v1399 = vunpack.c.h.b16 %v608
        %v1400 = vunpack.c.l.b16 %v609
        %v1401 = vunpack.c.h.b16 %v609
        %v1402 = vunpack.c.l.b16 %v610
        %v1403 = vunpack.c.h.b16 %v610
        %v1404 = vunpack.c.l.b16 %v611
        %v1405 = vunpack.c.h.b16 %v611
        %v1406 = vunpack.c.l.b16 %v612
        %v1407 = vunpack.c.h.b16 %v612
        %v1408 = vunpack.c.l.b16 %v613
        %v1409 = vunpack.c.h.b16 %v613
        %v1410 = vunpack.c.l.b16 %v614
        %v1411 = vunpack.c.h.b16 %v614
        %v1412 = vunpack.c.l.b16 %v615
        %v1413 = vunpack.c.h.b16 %v615
        %v1414 = vunpack.c.l.b16 %v616
        %v1415 = vunpack.c.h.b16 %v616
        %v1416 = vunpack.c.l.b16 %v617
        %v1417 = vunpack.c.h.b16 %v617
        %v1418 = vunpack.c.l.b16 %v618
        %v1419 = vunpack.c.h.b16 %v618
        %v1420 = vunpack.c.l.b16 %v619
        %v1421 = vunpack.c.h.b16 %v619
        %v1422 = vunpack.c.l.b16 %v620
        %v1423 = vunpack.c.h.b16 %v620
        %v1424 = vunpack.c.l.b16 %v621
        %v1425 = vunpack.c.h.b16 %v621
        %v1426 = vunpack.c.l.b16 %v622
        %v1427 = vunpack.c.h.b16 %v622
        %v1428 = vunpack.c.l.b16 %v623
        %v1429 = vunpack.c.h.b16 %v623
        %v1430 = vunpack.c.l.b16 %v624
        %v1431 = vunpack.c.h.b16 %v624
        %v1432 = vunpack.c.l.b16 %v625
        %v1433 = vunpack.c.h.b16 %v625
        %v1434 = vunpack.c.l.b16 %v626
        %v1435 = vunpack.c.h.b16 %v626
        %v1436 = vunpack.c.l.b16 %v627
        %v1437 = vunpack.c.h.b16 %v627
        %v1438 = vunpack.c.l.b16 %v628
        %v1439 = vunpack.c.h.b16 %v628
        %v1440 = vunpack.c.l.b16 %v629
        %v1441 = vunpack.c.h.b16 %v629
        %v1442 = vunpack.c.l.b16 %v630
        %v1443 = vunpack.c.h.b16 %v630
        %v1444 = vunpack.c.l.b16 %v631
        %v1445 = vunpack.c.h.b16 %v631
        %v1446 = vunpack.c.l.b16 %v632
        %v1447 = vunpack.c.h.b16 %v632
        %v1448 = vunpack.c.l.b16 %v633
        %v1449 = vunpack.c.h.b16 %v633
        %v1450 = vunpack.c.l.b16 %v634
        %v1451 = vunpack.c.h.b16 %v634
        %v1452 = vunpack.c.l.b16 %v635
        %v1453 = vunpack.c.h.b16 %v635
        %v1454 = vunpack.c.l.b16 %v636
        %v1455 = vunpack.c.h.b16 %v636
        %v1456 = vunpack.c.l.b16 %v637
        %v1457 = vunpack.c.h.b16 %v637
        %v1458 = vpack.c.b16 %v1038, %v1010
        %v1459 = vpack.c.b16 %v1039, %v1011
        %v1460 = vpack.c.b16 %v1040, %v1012
        %v1461 = vpack.c.b16 %v1041, %v1013
        %v1462 = vpack.c.b16 %v1042, %v1014
        %v1463 = vpack.c.b16 %v1043, %v1015
        %v1464 = vpack.c.b16 %v1044, %v1016
        %v1465 = vpack.c.b16 %v1045, %v1017
        %v1466 = vpack.c.b16 %v1046, %v1018
        %v1467 = vpack.c.b16 %v1047, %v1019
        %v1468 = vpack.c.b16 %v1048, %v1020
        %v1469 = vpack.c.b16 %v1049, %v1021
        %v1470 = vpack.c.b16 %v1050, %v1022
        %v1471 = vpack.c.b16 %v1051, %v1023
        %v1472 = vpack.c.b16 %v1052, %v1024
        %v1473 = vpack.c.b16 %v1053, %v1025
        %v1474 = vpack.c.b16 %v1054, %v1026
        %v1475 = vpack.c.b16 %v1055, %v1027
        %v1476 = vpack.c.b16 %v1056, %v1028
        %v1477 = vpack.c.b16 %v1057, %v1029
        %v1478 = vpack.c.b16 %v1058, %v1030
        %v1479 = vpack.c.b16 %v1059, %v1031
        %v1480 = vpack.c.b16 %v1060, %v1032
        %v1481 = vpack.c.b16 %v1061, %v1033
        %v1482 = vpack.c.b16 %v1062, %v1034
        %v1483 = vpack.c.b16 %v1063, %v1035
        %v1484 = vpack.c.b16 %v1064, %v1036
        %v1485 = vpack.c.b16 %v1065, %v1037
        %v1486 = vpack.c.b16 %v1094, %v1066
        %v1487 = vpack.c.b16 %v1095, %v1067
        %v1488 = vpack.c.b16 %v1096, %v1068
        %v1489 = vpack.c.b16 %v1097, %v1069
        %v1490 = vpack.c.b16 %v1098, %v1070
        %v1491 = vpack.c.b16 %v1099, %v1071
        %v1492 = vpack.c.b16 %v1100, %v1072
        %v1493 = vpack.c.b16 %v1101, %v1073
        %v1494 = vpack.c.b16 %v1102, %v1074
        %v1495 = vpack.c.b16 %v1103, %v1075
        %v1496 = vpack.c.b16 %v1104, %v1076
        %v1497 = vpack.c.b16 %v1105, %v1077
        %v1498 = vpack.c.b16 %v1106, %v1078
        %v1499 = vpack.c.b16 %v1107, %v1079
        %v1500 = vpack.c.b16 %v1108, %v1080
        %v1501 = vpack.c.b16 %v1109, %v1081
        %v1502 = vpack.c.b16 %v1110, %v1082
        %v1503 = vpack.c.b16 %v1111, %v1083
        %v1504 = vpack.c.b16 %v1112, %v1084
        %v1505 = vpack.c.b16 %v1113, %v1085
        %v1506 = vpack.c.b16 %v1114, %v1086
        %v1507 = vpack.c.b16 %v1115, %v1087
        %v1508 = vpack.c.b16 %v1116, %v1088
        %v1509 = vpack.c.b16 %v1117, %v1089
        %v1510 = vpack.c.b16 %v1118, %v1090
        %v1511 = vpack.c.b16 %v1119, %v1091
        %v1512 = vpack.c.b16 %v1120, %v1092
        %v1513 = vpack.c.b16 %v1121, %v1093
        %v1514 = vpack.c.b16 %v1150, %v1122
        %v1515 = vpack.c.b16 %v1151, %v1123
        %v1516 = vpack.c.b16 %v1152, %v1124
        %v1517 = vpack.c.b16 %v1153, %v1125
        %v1518 = vpack.c.b16 %v1154, %v1126
        %v1519 = vpack.c.b16 %v1155, %v1127
        %v1520 = vpack.c.b16 %v1156, %v1128
        %v1521 = vpack.c.b16 %v1157, %v1129
        %v1522 = vpack.c.b16 %v1158, %v1130
        %v1523 = vpack.c.b16 %v1159, %v1131
        %v1524 = vpack.c.b16 %v1160, %v1132
        %v1525 = vpack.c.b16 %v1161, %v1133
        %v1526 = vpack.c.b16 %v1162, %v1134
        %v1527 = vpack.c.b16 %v1163, %v1135
        %v1528 = vpack.c.b16 %v1164, %v1136
        %v1529 = vpack.c.b16 %v1165, %v1137
        %v1530 = vpack.c.b16 %v1166, %v1138
        %v1531 = vpack.c.b16 %v1167, %v1139
        %v1532 = vpack.c.b16 %v1168, %v1140
        %v1533 = vpack.c.b16 %v1169, %v1141
        %v1534 = vpack.c.b16 %v1170, %v1142
        %v1535 = vpack.c.b16 %v1171, %v1143
        %v1536 = vpack.c.b16 %v1172, %v1144
        %v1537 = vpack.c.b16 %v1173, %v1145
        %v1538 = vpack.c.b16 %v1174, %v1146
        %v1539 = vpack.c.b16 %v1175, %v1147
        %v1540 = vpack.c.b16 %v1176, %v1148
        %v1541 = vpack.c.b16 %v1177, %v1149
        %v1542 = vpack.c.b16 %v1206, %v1178
        %v1543 = vpack.c.b16 %v1207, %v1179
        %v1544 = vpack.c.b16 %v1208, %v1180
        %v1545 = vpack.c.b16 %v1209, %v1181
        %v1546 = vpack.c.b16 %v1210, %v1182
        %v1547 = vpack.c.b16 %v1211, %v1183
        %v1548 = vpack.c.b16 %v1212, %v1184
        %v1549 = vpack.c.b16 %v1213, %v1185
        %v1550 = vpack.c.b16 %v1214, %v1186
        %v1551 = vpack.c.b16 %v1215, %v1187
        %v1552 = vpack.c.b16 %v1216, %v1188
        %v1553 = vpack.c.b16 %v1217, %v1189
        %v1554 = vpack.c.b16 %v1218, %v1190
        %v1555 = vpack.c.b16 %v1219, %v1191
        %v1556 = vpack.c.b16 %v1220, %v1192
        %v1557 = vpack.c.b16 %v1221, %v1193
        %v1558 = vpack.c.b16 %v1222, %v1194
        %v1559 = vpack.c.b16 %v1223, %v1195
        %v1560 = vpack.c.b16 %v1224, %v1196
        %v1561 = vpack.c.b16 %v1225, %v1197
        %v1562 = vpack.c.b16 %v1226, %v1198
        %v1563 = vpack.c.b16 %v1227, %v1199
        %v1564 = vpack.c.b16 %v1228, %v1200
        %v1565 = vpack.c.b16 %v1229, %v1201
        %v1566 = vpack.c.b16 %v1230, %v1202
        %v1567 = vpack.c.b16 %v1231, %v1203
        %v1568 = vpack.c.b16 %v1232, %v1204
        %v1569 = vpack.c.b16 %v1233, %v1205
        %v1570 = vpack.c.b16 %v1262, %v1234
        %v1571 = vpack.c.b16 %v1263, %v1235
        %v1572 = vpack.c.b16 %v1264, %v1236
        %v1573 = vpack.c.b16 %v1265, %v1237
        %v1574 = vpack.c.b16 %v1266, %v1238
        %v1575 = vpack.c.b16 %v1267, %v1239
        %v1576 = vpack.c.b16 %v1268, %v1240
        %v1577 = vpack.c.b16 %v1269, %v1241
        %v1578 = vpack.c.b16 %v1270, %v1242
        %v1579 = vpack.c.b16 %v1271, %v1243
        %v1580 = vpack.c.b16 %v1272, %v1244
        %v1581 = vpack.c.b16 %v1273, %v1245
        %v1582 = vpack.c.b16 %v1274, %v1246
        %v1583 = vpack.c.b16 %v1275, %v1247
        %v1584 = vpack.c.b16 %v1276, %v1248
        %v1585 = vpack.c.b16 %v1277, %v1249
        %v1586 = vpack.c.b16 %v1278, %v1250
        %v1587 = vpack.c.b16 %v1279, %v1251
        %v1588 = vpack.c.b16 %v1280, %v1252
        %v1589 = vpack.c.b16 %v1281, %v1253
        %v1590 = vpack.c.b16 %v1282, %v1254
        %v1591 = vpack.c.b16 %v1283, %v1255
        %v1592 = vpack.c.b16 %v1284, %v1256
        %v1593 = vpack.c.b16 %v1285, %v1257
        %v1594 = vpack.c.b16 %v1286, %v1258
        %v1595 = vpack.c.b16 %v1287, %v1259
        %v1596 = vpack.c.b16 %v1288, %v1260
        %v1597 = vpack.c.b16 %v1289, %v1261
        %v1598 = vpack.c.b16 %v1318, %v1290
        %v1599 = vpack.c.b16 %v1319, %v1291
        %v1600 = vpack.c.b16 %v1320, %v1292
        %v1601 = vpack.c.b16 %v1321, %v1293
        %v1602 = vpack.c.b16 %v1322, %v1294
        %v1603 = vpack.c.b16 %v1323, %v1295
        %v1604 = vpack.c.b16 %v1324, %v1296
        %v1605 = vpack.c.b16 %v1325, %v1297
        %v1606 = vpack.c.b16 %v1326, %v1298
        %v1607 = vpack.c.b16 %v1327, %v1299
        %v1608 = vpack.c.b16 %v1328, %v1300
        %v1609 = vpack.c.b16 %v1329, %v1301
        %v1610 = vpack.c.b16 %v1330, %v1302
        %v1611 = vpack.c.b16 %v1331, %v1303
        %v1612 = vpack.c.b16 %v1332, %v1304
        %v1613 = vpack.c.b16 %v1333, %v1305
        %v1614 = vpack.c.b16 %v1334, %v1306
        %v1615 = vpack.c.b16 %v1335, %v1307
        %v1616 = vpack.c.b16 %v1336, %v1308
        %v1617 = vpack.c.b16 %v1337, %v1309
        %v1618 = vpack.c.b16 %v1338, %v1310
        %v1619 = vpack.c.b16 %v1339, %v1311
        %v1620 = vpack.c.b16 %v1340, %v1312
        %v1621 = vpack.c.b16 %v1341, %v1313
        %v1622 = vpack.c.b16 %v1342, %v1314
        %v1623 = vpack.c.b16 %v1343, %v1315
        %v1624 = vpack.c.b16 %v1344, %v1316
        %v1625 = vpack.c.b16 %v1345, %v1317
        %v1626 = vpack.c.b16 %v1374, %v1346
        %v1627 = vpack.c.b16 %v1375, %v1347
        %v1628 = vpack.c.b16 %v1376, %v1348
        %v1629 = vpack.c.b16 %v1377, %v1349
        %v1630 = vpack.c.b16 %v1378, %v1350
        %v1631 = vpack.c.b16 %v1379, %v1351
        %v1632 = vpack.c.b16 %v1380, %v1352
        %v1633 = vpack.c.b16 %v1381, %v1353
        %v1634 = vpack.c.b16 %v1382, %v1354
        %v1635 = vpack.c.b16 %v1383, %v1355
        %v1636 = vpack.c.b16 %v1384, %v1356
        %v1637 = vpack.c.b16 %v1385, %v1357
        %v1638 = vpack.c.b16 %v1386, %v1358
        %v1639 = vpack.c.b16 %v1387, %v1359
        %v1640 = vpack.c.b16 %v1388, %v1360
        %v1641 = vpack.c.b16 %v1389, %v1361
        %v1642 = vpack.c.b16 %v1390, %v1362
        %v1643 = vpack.c.b16 %v1391, %v1363
        %v1644 = vpack.c.b16 %v1392, %v1364
        %v1645 = vpack.c.b16 %v1393, %v1365
        %v1646 = vpack.c.b16 %v1394, %v1366
        %v1647 = vpack.c.b16 %v1395, %v1367
        %v1648 = vpack.c.b16 %v1396, %v1368
        %v1649 = vpack.c.b16 %v1397, %v1369
        %v1650 = vpack.c.b16 %v1398, %v1370
        %v1651 = vpack.c.b16 %v1399, %v1371
        %v1652 = vpack.c.b16 %v1400, %v1372
        %v1653 = vpack.c.b16 %v1401, %v1373
        %v1654 = vpack.c.b16 %v1430, %v1402
        %v1655 = vpack.c.b16 %v1431, %v1403
        %v1656 = vpack.c.b16 %v1432, %v1404
        %v1657 = vpack.c.b16 %v1433, %v1405
        %v1658 = vpack.c.b16 %v1434, %v1406
        %v1659 = vpack.c.b16 %v1435, %v1407
        %v1660 = vpack.c.b16 %v1436, %v1408
        %v1661 = vpack.c.b16 %v1437, %v1409
        %v1662 = vpack.c.b16 %v1438, %v1410
        %v1663 = vpack.c.b16 %v1439, %v1411
        %v1664 = vpack.c.b16 %v1440, %v1412
        %v1665 = vpack.c.b16 %v1441, %v1413
        %v1666 = vpack.c.b16 %v1442, %v1414
        %v1667 = vpack.c.b16 %v1443, %v1415
        %v1668 = vpack.c.b16 %v1444, %v1416
        %v1669 = vpack.c.b16 %v1445, %v1417
        %v1670 = vpack.c.b16 %v1446, %v1418
        %v1671 = vpack.c.b16 %v1447, %v1419
        %v1672 = vpack.c.b16 %v1448, %v1420
        %v1673 = vpack.c.b16 %v1449, %v1421
        %v1674 = vpack.c.b16 %v1450, %v1422
        %v1675 = vpack.c.b16 %v1451, %v1423
        %v1676 = vpack.c.b16 %v1452, %v1424
        %v1677 = vpack.c.b16 %v1453, %v1425
        %v1678 = vpack.c.b16 %v1454, %v1426
        %v1679 = vpack.c.b16 %v1455, %v1427
        %v1680 = vpack.c.b16 %v1456, %v1428
        %v1681 = vpack.c.b16 %v1457, %v1429
        %1906 = vmatprep.subr.bf16.mxu0 %v1459
        %1907 = vmatpush1.bf16.msra.mxu0 %v1458
        %1908 = vmatprep.subr.bf16.mxu0 %v1487
        %1909 = vmatpush1.bf16.msra.mxu0 %v1486
        %1910 = vmatprep.subr.bf16.mxu0 %v1515
        %1911 = vmatpush1.bf16.msra.mxu0 %v1514
        %1912 = vmatprep.subr.bf16.mxu0 %v1543
        %1913 = vmatpush1.bf16.msra.mxu0 %v1542
        %1914 = vmatprep.subr.bf16.mxu0 %v1571
        %1915 = vmatpush1.bf16.msra.mxu0 %v1570
        %1916 = vmatprep.subr.bf16.mxu0 %v1599
        %1917 = vmatpush1.bf16.msra.mxu0 %v1598
        %1918 = vmatprep.subr.bf16.mxu0 %v1627
        %1919 = vmatpush1.bf16.msra.mxu0 %v1626
        %1920 = vmatprep.subr.bf16.mxu0 %v1655
        %1921 = vmatpush1.bf16.msra.mxu0 %v1654
        %1922 = vmatprep.subr.bf16.mxu0 0
        %1923 = vmatpush1.bf16.msra.mxu0 0
        %1924 = vmatprep.subr.bf16.mxu0 0
        %1925 = vmatpush1.bf16.msra.mxu0 0
        %1926 = vmatprep.subr.bf16.mxu0 0
        %1927 = vmatpush1.bf16.msra.mxu0 0
        %1928 = vmatprep.subr.bf16.mxu0 0
        %1929 = vmatpush1.bf16.msra.mxu0 0
        %1930 = vmatprep.subr.bf16.mxu0 0
        %1931 = vmatpush1.bf16.msra.mxu0 0
        %1932 = vmatprep.subr.bf16.mxu0 0
        %1933 = vmatpush1.bf16.msra.mxu0 0
        %1934 = vmatprep.subr.bf16.mxu0 0
        %1935 = vmatpush1.bf16.msra.mxu0 0
        %1936 = vmatprep.subr.bf16.mxu0 0
        %1937 = vmatpush1.bf16.msra.mxu0 0
        %1938 = vmatprep.mubr.bf16.mxu0 0
        %1939 = vmatmul.mubr.bf16.gmra.mrb[0].mxu0 %v413
        %v1940 = vpop.f32.mrb[0].mxu0
        %v1941 = vadd.f32 %v649, %v1940
        %v1942 = vpop.f32.mrb[0].mxu0
        %v1943 = vadd.f32 %v653, %v1942
        %v1944 = vpop.f32.mrb[0].mxu0
        %v1945 = vpop.f32.mrb[0].mxu0
        %1946 = vdwg.mxu0
        %1947 = vmatprep.subr.bf16.mxu0 %v1461
        %1948 = vmatpush1.bf16.msra.mxu0 %v1460
        %1949 = vmatprep.subr.bf16.mxu0 %v1489
        %1950 = vmatpush1.bf16.msra.mxu0 %v1488
        %1951 = vmatprep.subr.bf16.mxu0 %v1517
        %1952 = vmatpush1.bf16.msra.mxu0 %v1516
        %1953 = vmatprep.subr.bf16.mxu0 %v1545
        %1954 = vmatpush1.bf16.msra.mxu0 %v1544
        %1955 = vmatprep.subr.bf16.mxu0 %v1573
        %1956 = vmatpush1.bf16.msra.mxu0 %v1572
        %1957 = vmatprep.subr.bf16.mxu0 %v1601
        %1958 = vmatpush1.bf16.msra.mxu0 %v1600
        %1959 = vmatprep.subr.bf16.mxu0 %v1629
        %1960 = vmatpush1.bf16.msra.mxu0 %v1628
        %1961 = vmatprep.subr.bf16.mxu0 %v1657
        %1962 = vmatpush1.bf16.msra.mxu0 %v1656
        %1963 = vmatprep.subr.bf16.mxu0 0
        %1964 = vmatpush1.bf16.msra.mxu0 0
        %1965 = vmatprep.subr.bf16.mxu0 0
        %1966 = vmatpush1.bf16.msra.mxu0 0
        %1967 = vmatprep.subr.bf16.mxu0 0
        %1968 = vmatpush1.bf16.msra.mxu0 0
        %1969 = vmatprep.subr.bf16.mxu0 0
        %1970 = vmatpush1.bf16.msra.mxu0 0
        %1971 = vmatprep.subr.bf16.mxu0 0
        %1972 = vmatpush1.bf16.msra.mxu0 0
        %1973 = vmatprep.subr.bf16.mxu0 0
        %1974 = vmatpush1.bf16.msra.mxu0 0
        %1975 = vmatprep.subr.bf16.mxu0 0
        %1976 = vmatpush1.bf16.msra.mxu0 0
        %1977 = vmatprep.subr.bf16.mxu0 0
        %1978 = vmatpush1.bf16.msra.mxu0 0
        %1979 = vmatprep.mubr.bf16.mxu0 0
        %1980 = vmatmul.mubr.bf16.gmra.mrb[0].mxu0 %v413
        %v1981 = vpop.f32.mrb[0].mxu0
        %v1982 = vadd.f32 %v657, %v1981
        %v1983 = vpop.f32.mrb[0].mxu0
        %v1984 = vadd.f32 %v661, %v1983
        %v1985 = vpop.f32.mrb[0].mxu0
        %v1986 = vpop.f32.mrb[0].mxu0
        %1987 = vdwg.mxu0
        %1988 = vmatprep.subr.bf16.mxu0 %v1463
        %1989 = vmatpush1.bf16.msra.mxu0 %v1462
        %1990 = vmatprep.subr.bf16.mxu0 %v1491
        %1991 = vmatpush1.bf16.msra.mxu0 %v1490
        %1992 = vmatprep.subr.bf16.mxu0 %v1519
        %1993 = vmatpush1.bf16.msra.mxu0 %v1518
        %1994 = vmatprep.subr.bf16.mxu0 %v1547
        %1995 = vmatpush1.bf16.msra.mxu0 %v1546
        %1996 = vmatprep.subr.bf16.mxu0 %v1575
        %1997 = vmatpush1.bf16.msra.mxu0 %v1574
        %1998 = vmatprep.subr.bf16.mxu0 %v1603
        %1999 = vmatpush1.bf16.msra.mxu0 %v1602
        %2000 = vmatprep.subr.bf16.mxu0 %v1631
        %2001 = vmatpush1.bf16.msra.mxu0 %v1630
        %2002 = vmatprep.subr.bf16.mxu0 %v1659
        %2003 = vmatpush1.bf16.msra.mxu0 %v1658
        %2004 = vmatprep.subr.bf16.mxu0 0
        %2005 = vmatpush1.bf16.msra.mxu0 0
        %2006 = vmatprep.subr.bf16.mxu0 0
        %2007 = vmatpush1.bf16.msra.mxu0 0
        %2008 = vmatprep.subr.bf16.mxu0 0
        %2009 = vmatpush1.bf16.msra.mxu0 0
        %2010 = vmatprep.subr.bf16.mxu0 0
        %2011 = vmatpush1.bf16.msra.mxu0 0
        %2012 = vmatprep.subr.bf16.mxu0 0
        %2013 = vmatpush1.bf16.msra.mxu0 0
        %2014 = vmatprep.subr.bf16.mxu0 0
        %2015 = vmatpush1.bf16.msra.mxu0 0
        %2016 = vmatprep.subr.bf16.mxu0 0
        %2017 = vmatpush1.bf16.msra.mxu0 0
        %2018 = vmatprep.subr.bf16.mxu0 0
        %2019 = vmatpush1.bf16.msra.mxu0 0
        %2020 = vmatprep.mubr.bf16.mxu0 0
        %2021 = vmatmul.mubr.bf16.gmra.mrb[0].mxu0 %v413
        %v2022 = vpop.f32.mrb[0].mxu0
        %v2023 = vadd.f32 %v665, %v2022
        %v2024 = vpop.f32.mrb[0].mxu0
        %v2025 = vadd.f32 %v669, %v2024
        %v2026 = vpop.f32.mrb[0].mxu0
        %v2027 = vpop.f32.mrb[0].mxu0
        %2028 = vdwg.mxu0
        %2029 = vmatprep.subr.bf16.mxu0 %v1465
        %2030 = vmatpush1.bf16.msra.mxu0 %v1464
        %2031 = vmatprep.subr.bf16.mxu0 %v1493
        %2032 = vmatpush1.bf16.msra.mxu0 %v1492
        %2033 = vmatprep.subr.bf16.mxu0 %v1521
        %2034 = vmatpush1.bf16.msra.mxu0 %v1520
        %2035 = vmatprep.subr.bf16.mxu0 %v1549
        %2036 = vmatpush1.bf16.msra.mxu0 %v1548
        %2037 = vmatprep.subr.bf16.mxu0 %v1577
        %2038 = vmatpush1.bf16.msra.mxu0 %v1576
        %2039 = vmatprep.subr.bf16.mxu0 %v1605
        %2040 = vmatpush1.bf16.msra.mxu0 %v1604
        %2041 = vmatprep.subr.bf16.mxu0 %v1633
        %2042 = vmatpush1.bf16.msra.mxu0 %v1632
        %2043 = vmatprep.subr.bf16.mxu0 %v1661
        %2044 = vmatpush1.bf16.msra.mxu0 %v1660
        %2045 = vmatprep.subr.bf16.mxu0 0
        %2046 = vmatpush1.bf16.msra.mxu0 0
        %2047 = vmatprep.subr.bf16.mxu0 0
        %2048 = vmatpush1.bf16.msra.mxu0 0
        %2049 = vmatprep.subr.bf16.mxu0 0
        %2050 = vmatpush1.bf16.msra.mxu0 0
        %2051 = vmatprep.subr.bf16.mxu0 0
        %2052 = vmatpush1.bf16.msra.mxu0 0
        %2053 = vmatprep.subr.bf16.mxu0 0
        %2054 = vmatpush1.bf16.msra.mxu0 0
        %2055 = vmatprep.subr.bf16.mxu0 0
        %2056 = vmatpush1.bf16.msra.mxu0 0
        %2057 = vmatprep.subr.bf16.mxu0 0
        %2058 = vmatpush1.bf16.msra.mxu0 0
        %2059 = vmatprep.subr.bf16.mxu0 0
        %2060 = vmatpush1.bf16.msra.mxu0 0
        %2061 = vmatprep.mubr.bf16.mxu0 0
        %2062 = vmatmul.mubr.bf16.gmra.mrb[0].mxu0 %v413
        %v2063 = vpop.f32.mrb[0].mxu0
        %v2064 = vadd.f32 %v673, %v2063
        %v2065 = vpop.f32.mrb[0].mxu0
        %v2066 = vadd.f32 %v677, %v2065
        %v2067 = vpop.f32.mrb[0].mxu0
        %v2068 = vpop.f32.mrb[0].mxu0
        %2069 = vdwg.mxu0
        %2070 = vmatprep.subr.bf16.mxu0 %v1467
        %2071 = vmatpush1.bf16.msra.mxu0 %v1466
        %2072 = vmatprep.subr.bf16.mxu0 %v1495
        %2073 = vmatpush1.bf16.msra.mxu0 %v1494
        %2074 = vmatprep.subr.bf16.mxu0 %v1523
        %2075 = vmatpush1.bf16.msra.mxu0 %v1522
        %2076 = vmatprep.subr.bf16.mxu0 %v1551
        %2077 = vmatpush1.bf16.msra.mxu0 %v1550
        %2078 = vmatprep.subr.bf16.mxu0 %v1579
        %2079 = vmatpush1.bf16.msra.mxu0 %v1578
        %2080 = vmatprep.subr.bf16.mxu0 %v1607
        %2081 = vmatpush1.bf16.msra.mxu0 %v1606
        %2082 = vmatprep.subr.bf16.mxu0 %v1635
        %2083 = vmatpush1.bf16.msra.mxu0 %v1634
        %2084 = vmatprep.subr.bf16.mxu0 %v1663
        %2085 = vmatpush1.bf16.msra.mxu0 %v1662
        %2086 = vmatprep.subr.bf16.mxu0 0
        %2087 = vmatpush1.bf16.msra.mxu0 0
        %2088 = vmatprep.subr.bf16.mxu0 0
        %2089 = vmatpush1.bf16.msra.mxu0 0
        %2090 = vmatprep.subr.bf16.mxu0 0
        %2091 = vmatpush1.bf16.msra.mxu0 0
        %2092 = vmatprep.subr.bf16.mxu0 0
        %2093 = vmatpush1.bf16.msra.mxu0 0
        %2094 = vmatprep.subr.bf16.mxu0 0
        %2095 = vmatpush1.bf16.msra.mxu0 0
        %2096 = vmatprep.subr.bf16.mxu0 0
        %2097 = vmatpush1.bf16.msra.mxu0 0
        %2098 = vmatprep.subr.bf16.mxu0 0
        %2099 = vmatpush1.bf16.msra.mxu0 0
        %2100 = vmatprep.subr.bf16.mxu0 0
        %2101 = vmatpush1.bf16.msra.mxu0 0
        %2102 = vmatprep.mubr.bf16.mxu0 0
        %2103 = vmatmul.mubr.bf16.gmra.mrb[0].mxu0 %v413
        %v2104 = vpop.f32.mrb[0].mxu0
        %v2105 = vadd.f32 %v681, %v2104
        %v2106 = vpop.f32.mrb[0].mxu0
        %v2107 = vadd.f32 %v685, %v2106
        %v2108 = vpop.f32.mrb[0].mxu0
        %v2109 = vpop.f32.mrb[0].mxu0
        %2110 = vdwg.mxu0
        %2111 = vmatprep.subr.bf16.mxu0 %v1469
        %2112 = vmatpush1.bf16.msra.mxu0 %v1468
        %2113 = vmatprep.subr.bf16.mxu0 %v1497
        %2114 = vmatpush1.bf16.msra.mxu0 %v1496
        %2115 = vmatprep.subr.bf16.mxu0 %v1525
        %2116 = vmatpush1.bf16.msra.mxu0 %v1524
        %2117 = vmatprep.subr.bf16.mxu0 %v1553
        %2118 = vmatpush1.bf16.msra.mxu0 %v1552
        %2119 = vmatprep.subr.bf16.mxu0 %v1581
        %2120 = vmatpush1.bf16.msra.mxu0 %v1580
        %2121 = vmatprep.subr.bf16.mxu0 %v1609
        %2122 = vmatpush1.bf16.msra.mxu0 %v1608
        %2123 = vmatprep.subr.bf16.mxu0 %v1637
        %2124 = vmatpush1.bf16.msra.mxu0 %v1636
        %2125 = vmatprep.subr.bf16.mxu0 %v1665
        %2126 = vmatpush1.bf16.msra.mxu0 %v1664
        %2127 = vmatprep.subr.bf16.mxu0 0
        %2128 = vmatpush1.bf16.msra.mxu0 0
        %2129 = vmatprep.subr.bf16.mxu0 0
        %2130 = vmatpush1.bf16.msra.mxu0 0
        %2131 = vmatprep.subr.bf16.mxu0 0
        %2132 = vmatpush1.bf16.msra.mxu0 0
        %2133 = vmatprep.subr.bf16.mxu0 0
        %2134 = vmatpush1.bf16.msra.mxu0 0
        %2135 = vmatprep.subr.bf16.mxu0 0
        %2136 = vmatpush1.bf16.msra.mxu0 0
        %2137 = vmatprep.subr.bf16.mxu0 0
        %2138 = vmatpush1.bf16.msra.mxu0 0
        %2139 = vmatprep.subr.bf16.mxu0 0
        %2140 = vmatpush1.bf16.msra.mxu0 0
        %2141 = vmatprep.subr.bf16.mxu0 0
        %2142 = vmatpush1.bf16.msra.mxu0 0
        %2143 = vmatprep.mubr.bf16.mxu0 0
        %2144 = vmatmul.mubr.bf16.gmra.mrb[0].mxu0 %v413
        %v2145 = vpop.f32.mrb[0].mxu0
        %v2146 = vadd.f32 %v689, %v2145
        %v2147 = vpop.f32.mrb[0].mxu0
        %v2148 = vadd.f32 %v693, %v2147
        %v2149 = vpop.f32.mrb[0].mxu0
        %v2150 = vpop.f32.mrb[0].mxu0
        %2151 = vdwg.mxu0
        %2152 = vmatprep.subr.bf16.mxu0 %v1471
        %2153 = vmatpush1.bf16.msra.mxu0 %v1470
        %2154 = vmatprep.subr.bf16.mxu0 %v1499
        %2155 = vmatpush1.bf16.msra.mxu0 %v1498
        %2156 = vmatprep.subr.bf16.mxu0 %v1527
        %2157 = vmatpush1.bf16.msra.mxu0 %v1526
        %2158 = vmatprep.subr.bf16.mxu0 %v1555
        %2159 = vmatpush1.bf16.msra.mxu0 %v1554
        %2160 = vmatprep.subr.bf16.mxu0 %v1583
        %2161 = vmatpush1.bf16.msra.mxu0 %v1582
        %2162 = vmatprep.subr.bf16.mxu0 %v1611
        %2163 = vmatpush1.bf16.msra.mxu0 %v1610
        %2164 = vmatprep.subr.bf16.mxu0 %v1639
        %2165 = vmatpush1.bf16.msra.mxu0 %v1638
        %2166 = vmatprep.subr.bf16.mxu0 %v1667
        %2167 = vmatpush1.bf16.msra.mxu0 %v1666
        %2168 = vmatprep.subr.bf16.mxu0 0
        %2169 = vmatpush1.bf16.msra.mxu0 0
        %2170 = vmatprep.subr.bf16.mxu0 0
        %2171 = vmatpush1.bf16.msra.mxu0 0
        %2172 = vmatprep.subr.bf16.mxu0 0
        %2173 = vmatpush1.bf16.msra.mxu0 0
        %2174 = vmatprep.subr.bf16.mxu0 0
        %2175 = vmatpush1.bf16.msra.mxu0 0
        %2176 = vmatprep.subr.bf16.mxu0 0
        %2177 = vmatpush1.bf16.msra.mxu0 0
        %2178 = vmatprep.subr.bf16.mxu0 0
        %2179 = vmatpush1.bf16.msra.mxu0 0
        %2180 = vmatprep.subr.bf16.mxu0 0
        %2181 = vmatpush1.bf16.msra.mxu0 0
        %2182 = vmatprep.subr.bf16.mxu0 0
        %2183 = vmatpush1.bf16.msra.mxu0 0
        %2184 = vmatprep.mubr.bf16.mxu0 0
        %2185 = vmatmul.mubr.bf16.gmra.mrb[0].mxu0 %v413
        %v2186 = vpop.f32.mrb[0].mxu0
        %v2187 = vadd.f32 %v697, %v2186
        %v2188 = vpop.f32.mrb[0].mxu0
        %v2189 = vadd.f32 %v701, %v2188
        %v2190 = vpop.f32.mrb[0].mxu0
        %v2191 = vpop.f32.mrb[0].mxu0
        %2192 = vdwg.mxu0
        %2193 = vmatprep.subr.bf16.mxu0 %v1473
        %2194 = vmatpush1.bf16.msra.mxu0 %v1472
        %2195 = vmatprep.subr.bf16.mxu0 %v1501
        %2196 = vmatpush1.bf16.msra.mxu0 %v1500
        %2197 = vmatprep.subr.bf16.mxu0 %v1529
        %2198 = vmatpush1.bf16.msra.mxu0 %v1528
        %2199 = vmatprep.subr.bf16.mxu0 %v1557
        %2200 = vmatpush1.bf16.msra.mxu0 %v1556
        %2201 = vmatprep.subr.bf16.mxu0 %v1585
        %2202 = vmatpush1.bf16.msra.mxu0 %v1584
        %2203 = vmatprep.subr.bf16.mxu0 %v1613
        %2204 = vmatpush1.bf16.msra.mxu0 %v1612
        %2205 = vmatprep.subr.bf16.mxu0 %v1641
        %2206 = vmatpush1.bf16.msra.mxu0 %v1640
        %2207 = vmatprep.subr.bf16.mxu0 %v1669
        %2208 = vmatpush1.bf16.msra.mxu0 %v1668
        %2209 = vmatprep.subr.bf16.mxu0 0
        %2210 = vmatpush1.bf16.msra.mxu0 0
        %2211 = vmatprep.subr.bf16.mxu0 0
        %2212 = vmatpush1.bf16.msra.mxu0 0
        %2213 = vmatprep.subr.bf16.mxu0 0
        %2214 = vmatpush1.bf16.msra.mxu0 0
        %2215 = vmatprep.subr.bf16.mxu0 0
        %2216 = vmatpush1.bf16.msra.mxu0 0
        %2217 = vmatprep.subr.bf16.mxu0 0
        %2218 = vmatpush1.bf16.msra.mxu0 0
        %2219 = vmatprep.subr.bf16.mxu0 0
        %2220 = vmatpush1.bf16.msra.mxu0 0
        %2221 = vmatprep.subr.bf16.mxu0 0
        %2222 = vmatpush1.bf16.msra.mxu0 0
        %2223 = vmatprep.subr.bf16.mxu0 0
        %2224 = vmatpush1.bf16.msra.mxu0 0
        %2225 = vmatprep.mubr.bf16.mxu0 0
        %2226 = vmatmul.mubr.bf16.gmra.mrb[0].mxu0 %v413
        %v2227 = vpop.f32.mrb[0].mxu0
        %v2228 = vadd.f32 %v705, %v2227
        %v2229 = vpop.f32.mrb[0].mxu0
        %v2230 = vadd.f32 %v709, %v2229
        %v2231 = vpop.f32.mrb[0].mxu0
        %v2232 = vpop.f32.mrb[0].mxu0
        %2233 = vdwg.mxu0
        %2234 = vmatprep.subr.bf16.mxu0 %v1475
        %2235 = vmatpush1.bf16.msra.mxu0 %v1474
        %2236 = vmatprep.subr.bf16.mxu0 %v1503
        %2237 = vmatpush1.bf16.msra.mxu0 %v1502
        %2238 = vmatprep.subr.bf16.mxu0 %v1531
        %2239 = vmatpush1.bf16.msra.mxu0 %v1530
        %2240 = vmatprep.subr.bf16.mxu0 %v1559
        %2241 = vmatpush1.bf16.msra.mxu0 %v1558
        %2242 = vmatprep.subr.bf16.mxu0 %v1587
        %2243 = vmatpush1.bf16.msra.mxu0 %v1586
        %2244 = vmatprep.subr.bf16.mxu0 %v1615
        %2245 = vmatpush1.bf16.msra.mxu0 %v1614
        %2246 = vmatprep.subr.bf16.mxu0 %v1643
        %2247 = vmatpush1.bf16.msra.mxu0 %v1642
        %2248 = vmatprep.subr.bf16.mxu0 %v1671
        %2249 = vmatpush1.bf16.msra.mxu0 %v1670
        %2250 = vmatprep.subr.bf16.mxu0 0
        %2251 = vmatpush1.bf16.msra.mxu0 0
        %2252 = vmatprep.subr.bf16.mxu0 0
        %2253 = vmatpush1.bf16.msra.mxu0 0
        %2254 = vmatprep.subr.bf16.mxu0 0
        %2255 = vmatpush1.bf16.msra.mxu0 0
        %2256 = vmatprep.subr.bf16.mxu0 0
        %2257 = vmatpush1.bf16.msra.mxu0 0
        %2258 = vmatprep.subr.bf16.mxu0 0
        %2259 = vmatpush1.bf16.msra.mxu0 0
        %2260 = vmatprep.subr.bf16.mxu0 0
        %2261 = vmatpush1.bf16.msra.mxu0 0
        %2262 = vmatprep.subr.bf16.mxu0 0
        %2263 = vmatpush1.bf16.msra.mxu0 0
        %2264 = vmatprep.subr.bf16.mxu0 0
        %2265 = vmatpush1.bf16.msra.mxu0 0
        %2266 = vmatprep.mubr.bf16.mxu0 0
        %2267 = vmatmul.mubr.bf16.gmra.mrb[0].mxu0 %v413
        %v2268 = vpop.f32.mrb[0].mxu0
        %v2269 = vadd.f32 %v713, %v2268
        %v2270 = vpop.f32.mrb[0].mxu0
        %v2271 = vadd.f32 %v717, %v2270
        %v2272 = vpop.f32.mrb[0].mxu0
        %v2273 = vpop.f32.mrb[0].mxu0
        %2274 = vdwg.mxu0
        %2275 = vmatprep.subr.bf16.mxu0 %v1477
        %2276 = vmatpush1.bf16.msra.mxu0 %v1476
        %2277 = vmatprep.subr.bf16.mxu0 %v1505
        %2278 = vmatpush1.bf16.msra.mxu0 %v1504
        %2279 = vmatprep.subr.bf16.mxu0 %v1533
        %2280 = vmatpush1.bf16.msra.mxu0 %v1532
        %2281 = vmatprep.subr.bf16.mxu0 %v1561
        %2282 = vmatpush1.bf16.msra.mxu0 %v1560
        %2283 = vmatprep.subr.bf16.mxu0 %v1589
        %2284 = vmatpush1.bf16.msra.mxu0 %v1588
        %2285 = vmatprep.subr.bf16.mxu0 %v1617
        %2286 = vmatpush1.bf16.msra.mxu0 %v1616
        %2287 = vmatprep.subr.bf16.mxu0 %v1645
        %2288 = vmatpush1.bf16.msra.mxu0 %v1644
        %2289 = vmatprep.subr.bf16.mxu0 %v1673
        %2290 = vmatpush1.bf16.msra.mxu0 %v1672
        %2291 = vmatprep.subr.bf16.mxu0 0
        %2292 = vmatpush1.bf16.msra.mxu0 0
        %2293 = vmatprep.subr.bf16.mxu0 0
        %2294 = vmatpush1.bf16.msra.mxu0 0
        %2295 = vmatprep.subr.bf16.mxu0 0
        %2296 = vmatpush1.bf16.msra.mxu0 0
        %2297 = vmatprep.subr.bf16.mxu0 0
        %2298 = vmatpush1.bf16.msra.mxu0 0
        %2299 = vmatprep.subr.bf16.mxu0 0
        %2300 = vmatpush1.bf16.msra.mxu0 0
        %2301 = vmatprep.subr.bf16.mxu0 0
        %2302 = vmatpush1.bf16.msra.mxu0 0
        %2303 = vmatprep.subr.bf16.mxu0 0
        %2304 = vmatpush1.bf16.msra.mxu0 0
        %2305 = vmatprep.subr.bf16.mxu0 0
        %2306 = vmatpush1.bf16.msra.mxu0 0
        %2307 = vmatprep.mubr.bf16.mxu0 0
        %2308 = vmatmul.mubr.bf16.gmra.mrb[0].mxu0 %v413
        %v2309 = vpop.f32.mrb[0].mxu0
        %v2310 = vadd.f32 %v721, %v2309
        %v2311 = vpop.f32.mrb[0].mxu0
        %v2312 = vadd.f32 %v725, %v2311
        %v2313 = vpop.f32.mrb[0].mxu0
        %v2314 = vpop.f32.mrb[0].mxu0
        %2315 = vdwg.mxu0
        %2316 = vmatprep.subr.bf16.mxu0 %v1479
        %2317 = vmatpush1.bf16.msra.mxu0 %v1478
        %2318 = vmatprep.subr.bf16.mxu0 %v1507
        %2319 = vmatpush1.bf16.msra.mxu0 %v1506
        %2320 = vmatprep.subr.bf16.mxu0 %v1535
        %2321 = vmatpush1.bf16.msra.mxu0 %v1534
        %2322 = vmatprep.subr.bf16.mxu0 %v1563
        %2323 = vmatpush1.bf16.msra.mxu0 %v1562
        %2324 = vmatprep.subr.bf16.mxu0 %v1591
        %2325 = vmatpush1.bf16.msra.mxu0 %v1590
        %2326 = vmatprep.subr.bf16.mxu0 %v1619
        %2327 = vmatpush1.bf16.msra.mxu0 %v1618
        %2328 = vmatprep.subr.bf16.mxu0 %v1647
        %2329 = vmatpush1.bf16.msra.mxu0 %v1646
        %2330 = vmatprep.subr.bf16.mxu0 %v1675
        %2331 = vmatpush1.bf16.msra.mxu0 %v1674
        %2332 = vmatprep.subr.bf16.mxu0 0
        %2333 = vmatpush1.bf16.msra.mxu0 0
        %2334 = vmatprep.subr.bf16.mxu0 0
        %2335 = vmatpush1.bf16.msra.mxu0 0
        %2336 = vmatprep.subr.bf16.mxu0 0
        %2337 = vmatpush1.bf16.msra.mxu0 0
        %2338 = vmatprep.subr.bf16.mxu0 0
        %2339 = vmatpush1.bf16.msra.mxu0 0
        %2340 = vmatprep.subr.bf16.mxu0 0
        %2341 = vmatpush1.bf16.msra.mxu0 0
        %2342 = vmatprep.subr.bf16.mxu0 0
        %2343 = vmatpush1.bf16.msra.mxu0 0
        %2344 = vmatprep.subr.bf16.mxu0 0
        %2345 = vmatpush1.bf16.msra.mxu0 0
        %2346 = vmatprep.subr.bf16.mxu0 0
        %2347 = vmatpush1.bf16.msra.mxu0 0
        %2348 = vmatprep.mubr.bf16.mxu0 0
        %2349 = vmatmul.mubr.bf16.gmra.mrb[0].mxu0 %v413
        %v2350 = vpop.f32.mrb[0].mxu0
        %v2351 = vadd.f32 %v729, %v2350
        %v2352 = vpop.f32.mrb[0].mxu0
        %v2353 = vadd.f32 %v733, %v2352
        %v2354 = vpop.f32.mrb[0].mxu0
        %v2355 = vpop.f32.mrb[0].mxu0
        %2356 = vdwg.mxu0
        %2357 = vmatprep.subr.bf16.mxu0 %v1481
        %2358 = vmatpush1.bf16.msra.mxu0 %v1480
        %2359 = vmatprep.subr.bf16.mxu0 %v1509
        %2360 = vmatpush1.bf16.msra.mxu0 %v1508
        %2361 = vmatprep.subr.bf16.mxu0 %v1537
        %2362 = vmatpush1.bf16.msra.mxu0 %v1536
        %2363 = vmatprep.subr.bf16.mxu0 %v1565
        %2364 = vmatpush1.bf16.msra.mxu0 %v1564
        %2365 = vmatprep.subr.bf16.mxu0 %v1593
        %2366 = vmatpush1.bf16.msra.mxu0 %v1592
        %2367 = vmatprep.subr.bf16.mxu0 %v1621
        %2368 = vmatpush1.bf16.msra.mxu0 %v1620
        %2369 = vmatprep.subr.bf16.mxu0 %v1649
        %2370 = vmatpush1.bf16.msra.mxu0 %v1648
        %2371 = vmatprep.subr.bf16.mxu0 %v1677
        %2372 = vmatpush1.bf16.msra.mxu0 %v1676
        %2373 = vmatprep.subr.bf16.mxu0 0
        %2374 = vmatpush1.bf16.msra.mxu0 0
        %2375 = vmatprep.subr.bf16.mxu0 0
        %2376 = vmatpush1.bf16.msra.mxu0 0
        %2377 = vmatprep.subr.bf16.mxu0 0
        %2378 = vmatpush1.bf16.msra.mxu0 0
        %2379 = vmatprep.subr.bf16.mxu0 0
        %2380 = vmatpush1.bf16.msra.mxu0 0
        %2381 = vmatprep.subr.bf16.mxu0 0
        %2382 = vmatpush1.bf16.msra.mxu0 0
        %2383 = vmatprep.subr.bf16.mxu0 0
        %2384 = vmatpush1.bf16.msra.mxu0 0
        %2385 = vmatprep.subr.bf16.mxu0 0
        %2386 = vmatpush1.bf16.msra.mxu0 0
        %2387 = vmatprep.subr.bf16.mxu0 0
        %2388 = vmatpush1.bf16.msra.mxu0 0
        %2389 = vmatprep.mubr.bf16.mxu0 0
        %2390 = vmatmul.mubr.bf16.gmra.mrb[0].mxu0 %v413
        %v2391 = vpop.f32.mrb[0].mxu0
        %v2392 = vadd.f32 %v737, %v2391
        %v2393 = vpop.f32.mrb[0].mxu0
        %v2394 = vadd.f32 %v741, %v2393
        %v2395 = vpop.f32.mrb[0].mxu0
        %v2396 = vpop.f32.mrb[0].mxu0
        %2397 = vdwg.mxu0
        %2398 = vmatprep.subr.bf16.mxu0 %v1483
        %2399 = vmatpush1.bf16.msra.mxu0 %v1482
        %2400 = vmatprep.subr.bf16.mxu0 %v1511
        %2401 = vmatpush1.bf16.msra.mxu0 %v1510
        %2402 = vmatprep.subr.bf16.mxu0 %v1539
        %2403 = vmatpush1.bf16.msra.mxu0 %v1538
        %2404 = vmatprep.subr.bf16.mxu0 %v1567
        %2405 = vmatpush1.bf16.msra.mxu0 %v1566
        %2406 = vmatprep.subr.bf16.mxu0 %v1595
        %2407 = vmatpush1.bf16.msra.mxu0 %v1594
        %2408 = vmatprep.subr.bf16.mxu0 %v1623
        %2409 = vmatpush1.bf16.msra.mxu0 %v1622
        %2410 = vmatprep.subr.bf16.mxu0 %v1651
        %2411 = vmatpush1.bf16.msra.mxu0 %v1650
        %2412 = vmatprep.subr.bf16.mxu0 %v1679
        %2413 = vmatpush1.bf16.msra.mxu0 %v1678
        %2414 = vmatprep.subr.bf16.mxu0 0
        %2415 = vmatpush1.bf16.msra.mxu0 0
        %2416 = vmatprep.subr.bf16.mxu0 0
        %2417 = vmatpush1.bf16.msra.mxu0 0
        %2418 = vmatprep.subr.bf16.mxu0 0
        %2419 = vmatpush1.bf16.msra.mxu0 0
        %2420 = vmatprep.subr.bf16.mxu0 0
        %2421 = vmatpush1.bf16.msra.mxu0 0
        %2422 = vmatprep.subr.bf16.mxu0 0
        %2423 = vmatpush1.bf16.msra.mxu0 0
        %2424 = vmatprep.subr.bf16.mxu0 0
        %2425 = vmatpush1.bf16.msra.mxu0 0
        %2426 = vmatprep.subr.bf16.mxu0 0
        %2427 = vmatpush1.bf16.msra.mxu0 0
        %2428 = vmatprep.subr.bf16.mxu0 0
        %2429 = vmatpush1.bf16.msra.mxu0 0
        %2430 = vmatprep.mubr.bf16.mxu0 0
        %2431 = vmatmul.mubr.bf16.gmra.mrb[0].mxu0 %v413
        %v2432 = vpop.f32.mrb[0].mxu0
        %v2433 = vadd.f32 %v745, %v2432
        %v2434 = vpop.f32.mrb[0].mxu0
        %v2435 = vadd.f32 %v749, %v2434
        %v2436 = vpop.f32.mrb[0].mxu0
        %v2437 = vpop.f32.mrb[0].mxu0
        %2438 = vdwg.mxu0
        %2439 = vmatprep.subr.bf16.mxu0 %v1485
        %2440 = vmatpush1.bf16.msra.mxu0 %v1484
        %2441 = vmatprep.subr.bf16.mxu0 %v1513
        %2442 = vmatpush1.bf16.msra.mxu0 %v1512
        %2443 = vmatprep.subr.bf16.mxu0 %v1541
        %2444 = vmatpush1.bf16.msra.mxu0 %v1540
        %2445 = vmatprep.subr.bf16.mxu0 %v1569
        %2446 = vmatpush1.bf16.msra.mxu0 %v1568
        %2447 = vmatprep.subr.bf16.mxu0 %v1597
        %2448 = vmatpush1.bf16.msra.mxu0 %v1596
        %2449 = vmatprep.subr.bf16.mxu0 %v1625
        %2450 = vmatpush1.bf16.msra.mxu0 %v1624
        %2451 = vmatprep.subr.bf16.mxu0 %v1653
        %2452 = vmatpush1.bf16.msra.mxu0 %v1652
        %2453 = vmatprep.subr.bf16.mxu0 %v1681
        %2454 = vmatpush1.bf16.msra.mxu0 %v1680
        %2455 = vmatprep.subr.bf16.mxu0 0
        %2456 = vmatpush1.bf16.msra.mxu0 0
        %2457 = vmatprep.subr.bf16.mxu0 0
        %2458 = vmatpush1.bf16.msra.mxu0 0
        %2459 = vmatprep.subr.bf16.mxu0 0
        %2460 = vmatpush1.bf16.msra.mxu0 0
        %2461 = vmatprep.subr.bf16.mxu0 0
        %2462 = vmatpush1.bf16.msra.mxu0 0
        %2463 = vmatprep.subr.bf16.mxu0 0
        %2464 = vmatpush1.bf16.msra.mxu0 0
        %2465 = vmatprep.subr.bf16.mxu0 0
        %2466 = vmatpush1.bf16.msra.mxu0 0
        %2467 = vmatprep.subr.bf16.mxu0 0
        %2468 = vmatpush1.bf16.msra.mxu0 0
        %2469 = vmatprep.subr.bf16.mxu0 0
        %2470 = vmatpush1.bf16.msra.mxu0 0
        %2471 = vmatprep.mubr.bf16.mxu0 0
        %2472 = vmatmul.mubr.bf16.gmra.mrb[0].mxu0 %v413
        %v2473 = vpop.f32.mrb[0].mxu0
        %v2474 = vadd.f32 %v753, %v2473
        %v2475 = vpop.f32.mrb[0].mxu0
        %v2476 = vadd.f32 %v757, %v2475
        %v2477 = vpop.f32.mrb[0].mxu0
        %v2478 = vpop.f32.mrb[0].mxu0
        %2479 = vdwg.mxu0
        %2480 = vst [vmem:[%s317] sm:$0xff] %v1941
        %2481 = vst [vmem:[%s317 + $0x8] sm:$0xff] %v1943
        %2482 = vst [vmem:[%s317 + $0x10] sm:$0xff] %v1982
        %2483 = vst [vmem:[%s317 + $0x18] sm:$0xff] %v1984
        %2484 = vst [vmem:[%s317 + $0x20] sm:$0xff] %v2023
        %2485 = vst [vmem:[%s317 + $0x28] sm:$0xff] %v2025
        %2486 = vst [vmem:[%s317 + $0x30] sm:$0xff] %v2064
        %2487 = vst [vmem:[%s317 + $0x38] sm:$0xff] %v2066
        %2488 = vst [vmem:[%s317 + $0x40] sm:$0xff] %v2105
        %2489 = vst [vmem:[%s317 + $0x48] sm:$0xff] %v2107
        %2490 = vst [vmem:[%s317 + $0x50] sm:$0xff] %v2146
        %2491 = vst [vmem:[%s317 + $0x58] sm:$0xff] %v2148
        %2492 = vst [vmem:[%s317 + $0x60] sm:$0xff] %v2187
        %2493 = vst [vmem:[%s317 + $0x68] sm:$0xff] %v2189
        %2494 = vst [vmem:[%s317 + $0x70] sm:$0xff] %v2228
        %2495 = vst [vmem:[%s317 + $0x78] sm:$0xff] %v2230
        %2496 = vst [vmem:[%s317 + $0x80] sm:$0xff] %v2269
        %2497 = vst [vmem:[%s317 + $0x88] sm:$0xff] %v2271
        %2498 = vst [vmem:[%s317 + $0x90] sm:$0xff] %v2310
        %2499 = vst [vmem:[%s317 + $0x98] sm:$0xff] %v2312
        %2500 = vst [vmem:[%s317 + $0xa0] sm:$0xff] %v2351
        %2501 = vst [vmem:[%s317 + $0xa8] sm:$0xff] %v2353
        %2502 = vst [vmem:[%s317 + $0xb0] sm:$0xff] %v2392
        %2503 = vst [vmem:[%s317 + $0xb8] sm:$0xff] %v2394
        %2504 = vst [vmem:[%s317 + $0xc0] sm:$0xff] %v2433
        %2505 = vst [vmem:[%s317 + $0xc8] sm:$0xff] %v2435
        %2506 = vst [vmem:[%s317 + $0xd0] sm:$0xff] %v2474
        %2507 = vst [vmem:[%s317 + $0xd8] sm:$0xff] %v2476
        %s2508 = sand.u32 %s147, 1
        %s2509 = scalar_lea.sflag [#allocation4], %s2508
        %s2510 = sand.u32 %s147, 1
        %s2511 = smul.addr %s2510, 224
        %s2512 = scalar_lea.vmem [#allocation11], %s2511
        // Predicated region
        $region61: #{mlp_forward.1} parent=39 // pred_check
          %p2513 = pneg %p157
        $region62: #{mlp_forward.1} parent=39 // pred_check_branch
          %2515 = sbr.rel (%p2513) target = $region64
        $region63: #{mlp_forward.1} parent=39 // pred_region
          %s2516 = smul.u32 28, %s24
          %s2517 = ssub.s32 55, %s2516
          %p2518 = scmp.lt.s32.totalorder %s2517, 28
          %s2519 = scalar_select %p2518, %s2517, 28
          %s2520 = smul.u32 128, %s2519
          %s2522 = ssub.s32 3584, %s2520
          %2523 = vsyncadd %s2509, %s2522
          %p2524 = scmp.ne.s32.totalorder 0, %s2520
          %s2525 = smul.addr %s2516, 128
          %s2526 = scalar_lea.hbm %s5, %s2525
          %s2527 = smul.u32 %s2519, 8
          %s2528 = sshll.u32 %s2527, 4
          %s2529 = sshll.u32 %s2512, 4
          %s2530 = int_to_ptr.vmem [resolvable:$true] %s2529
          %2532 = dma.vmem_to_hbm [thread:$0]  (%p2524), %s2530, %s2528, %s2526, %s2509
        $region64: #{mlp_forward.1} parent=39 // pred_fallthru
          _
      $region40: #{mlp_forward.1} parent=5 // pred_fallthru
        _
      %p2533 = scmp.le.s32.totalorder 2, %s19
      // Predicated region
      $region65: #{mlp_forward.1} parent=5 // pred_check
        %p2534 = pneg %p2533
      $region66: #{mlp_forward.1} parent=5 // pred_check_branch
        %2536 = sbr.rel (%p2534) target = $region68
      $region67: #{mlp_forward.1} parent=5 // pred_region
        %s2537 = ssub.s32 %s19, 2
        // Predicated region
        $region69: #{mlp_forward.1} parent=67 // pred_check
          %p2538 = pneg %p163
        $region70: #{mlp_forward.1} parent=67 // pred_check_branch
          %2540 = sbr.rel (%p2538) target = $region72
        $region71: #{mlp_forward.1} parent=67 // pred_region
          %s2541 = sand.u32 %s148, 1
          %s2542 = scalar_lea.sflag [#allocation4], %s2541
          %s2543 = sand.u32 %s148, 1
          %s2544 = smul.addr %s2543, 224
          %s2545 = scalar_lea.vmem [#allocation11], %s2544
          %2546 = dma.done %s2542, 3584
        $region72: #{mlp_forward.1} parent=67 // pred_fallthru
          _
      $region68: #{mlp_forward.1} parent=5 // pred_fallthru
        _
    $region6: #{mlp_forward.1} parent=1 // loop_footer
      %s23 = sadd.s32 1, %s19
    $region7: #{mlp_forward.1} parent=1 // loop_footer_branch
      %18 = sbr.rel target = $region3
    $region8: #{mlp_forward.1} parent=1 // loop_exit
      _
    %2547 = vsyncpa [#allocation3], 1
    %s2548 = scalar_lea.sflag [#allocation3], 1
    %2549 = vsyncpa %s2548, 1
    %2550 = vsyncpa [#allocation6], 1
    %2551 = vsyncpa [#allocation9], 1
    %s2552 = scalar_lea.sflag [#allocation9], 1
    %2553 = vsyncpa %s2552, 1
    %2554 = vsyncpa [#allocation4], 1
    %s2555 = scalar_lea.sflag [#allocation4], 1
    %2556 = vsyncpa %s2555, 1

</llo_original>
